<compile_context>
chip_gen: v6e
topology: v6e:2x2x1
jax: 0.10.0
libtpu: 0.0.40
codegen_flags: <defaults>
</compile_context>

<pallas_src>
import jax
import jax.numpy as jnp
import numpy as np
from jax import lax
from jax.experimental import pallas as pl
from jax.experimental.pallas import tpu as pltpu

STEP_LIMIT = 19.0      # self.step = var(19)
COMPARISON_BAR = 0.0   # self.comparison_bar = var(0.0)
MAX_ITERS = 19         # step counter starts at 0, +1 per iteration
D = 9                  # number of program variables
LANE = 128             # lane width
CHUNK = 8              # sublane chunk: one (8,128) vreg per variable


def _program_kernel(w_ref, b_ref, x_ref, o_ref):
    # Weights/bias: 9 scalars read once from SMEM, splat once to vregs
    # (hoisted out of the unrolled loop and the chunk loop).
    shp = (CHUNK, LANE)
    w00 = jnp.full(shp, w_ref[0, 0], jnp.float32)
    w01 = jnp.full(shp, w_ref[0, 1], jnp.float32)
    w02 = jnp.full(shp, w_ref[0, 2], jnp.float32)
    w10 = jnp.full(shp, w_ref[1, 0], jnp.float32)
    w11 = jnp.full(shp, w_ref[1, 1], jnp.float32)
    w12 = jnp.full(shp, w_ref[1, 2], jnp.float32)
    b0 = jnp.full(shp, b_ref[0, 0], jnp.float32)
    b1 = jnp.full(shp, b_ref[0, 1], jnp.float32)
    b2 = jnp.full(shp, b_ref[0, 2], jnp.float32)

    num_chunks = x_ref.shape[1] // CHUNK     # cb is a multiple of CHUNK

    @pl.loop(0, num_chunks)
    def _(c):
        r = pl.multiple_of(c * CHUNK, CHUNK)
        rows = pl.ds(r, CHUNK)

        # Load the 9 program variables for this (8,128) batch chunk once.
        st0 = tuple(x_ref[k, rows, :] for k in range(D))

        def body(_, st):
            x0, x1, x2, x3, x4, x5, x6, x7, x8 = st
            # While(target_idx=[5], test=19): lane active while x[5] < 19
            # TODO(synk): strictness of the While test (`<` vs `<=`) assumed `<`.
            active = x5 < STEP_LIMIT
            af = active.astype(jnp.float32)            # increment mask

            # assign_probability: x[[2,3,4]] = Linear(2->3)(x[[0,1]])  (VPU)
            p2 = x0 * w00 + x1 * w10 + b0
            p3 = x0 * w01 + x1 * w11 + b1
            p4 = x0 * w02 + x1 * w12 + b2

            # assign_a / assign_b / assign_c
            a6 = p3 - p2
            a7 = p4 - p2
            a8 = p4 - p3

            # ifelse_angle: nested ITE on vars 6/7/8 -> delta in {-1, 0, +1}
            d_b = jnp.where(a7 <= COMPARISON_BAR, -1.0, 1.0)   # down / up
            d_c = jnp.where(a8 <= COMPARISON_BAR, 0.0, 1.0)    # right / up
            delta = jnp.where(a6 <= COMPARISON_BAR, d_b, d_c)

            # updates (masked per variable; increments become adds)
            x0 = x0 + delta * af
            x1 = x1 + af                                 # forward_update
            x5 = x5 + af                                 # step_update
            x2 = jnp.where(active, p2, x2)
            x3 = jnp.where(active, p3, x3)
            x4 = jnp.where(active, p4, x4)
            x6 = jnp.where(active, a6, x6)
            x7 = jnp.where(active, a7, x7)
            x8 = jnp.where(active, a8, x8)
            # TODO(synk): Trajectory() only records intermediate states on the
            # Python side (pure side effect) — not representable as output.
            return (x0, x1, x2, x3, x4, x5, x6, x7, x8)

        st = lax.fori_loop(0, MAX_ITERS, body, st0, unroll=True)

        # Store the 9 variables back once per chunk.
        for k in range(D):
            o_ref[k, rows, :] = st[k]


def program_forward(x, W, b, *, block_chunks=256):
    """x: (B, 9) f32 state; W: (2, 3); b: (1, 3). Returns final (B, 9) state.

    block_chunks = number of (8x128) batch chunks per Pallas block
    (256 -> 32768 batch lanes, ~1.2 MiB block).  For huge batches on v7x keep
    block_chunks small enough that the grid has >= 4 steps (megacore + pipeline).
    """
    B = x.shape[0]
    assert x.shape[1] == D

    block_chunks = max(CHUNK, (block_chunks // CHUNK) * CHUNK)
    C = pl.cdiv(B, LANE)                                   # 128-lane chunks
    Cp = max(CHUNK, pl.cdiv(C, CHUNK) * CHUNK)             # multiple of 8
    Bp = Cp * LANE
    cb = min(block_chunks, Cp)
    num_tiles = pl.cdiv(Cp, cb)

    # Layout plumbing (single fused copy): (B,9) -> lane-dense (9, Cp, 128).
    xt = jnp.asarray(x, jnp.float32).T                     # (9, B)
    if Bp != B:
        xt = jnp.pad(xt, ((0, 0), (0, Bp - B)))            # padded lanes inert
    xt = xt.reshape(D, Cp, LANE)

    out = pl.pallas_call(
        _program_kernel,
        out_shape=jax.ShapeDtypeStruct((D, Cp, LANE), jnp.float32),
        grid=(num_tiles,),
        in_specs=[
            pl.BlockSpec((2, 3), lambda i: (0, 0),
                         memory_space=pltpu.MemorySpace.SMEM),
            pl.BlockSpec((1, 3), lambda i: (0, 0),
                         memory_space=pltpu.MemorySpace.SMEM),
            pl.BlockSpec((D, cb, LANE), lambda i: (0, i, 0)),
        ],
        out_specs=pl.BlockSpec((D, cb, LANE), lambda i: (0, i, 0)),
        compiler_params=pltpu.CompilerParams(
            dimension_semantics=("parallel",)),
    )(W, b, xt)

    return out.reshape(D, Bp)[:, :B].T                     # back to (B, 9)


def program_forward_ref(x, W, b):
    """Pure-JAX reference mirroring the PyTorch program semantics."""
    def body(_, st):
        x0 = st[:, 0:1]; x1 = st[:, 1:2]; x5 = st[:, 5:6]
        active = x5 < STEP_LIMIT
        p = st[:, 0:2] @ W + b
        p2, p3, p4 = p[:, 0:1], p[:, 1:2], p[:, 2:3]
        a6, a7, a8 = p3 - p2, p4 - p2, p4 - p3
        x0_b = jnp.where(a7 <= COMPARISON_BAR, x0 - 1.0, x0 + 1.0)
        x0_c = jnp.where(a8 <= COMPARISON_BAR, x0, x0 + 1.0)
        x0_new = jnp.where(a6 <= COMPARISON_BAR, x0_b, x0_c)
        ns = jnp.concatenate(
            [x0_new, x1 + 1.0, p2, p3, p4, x5 + 1.0, a6, a7, a8], axis=1)
        return jnp.where(active, ns, st)
    return lax.fori_loop(0, MAX_ITERS, body, x)


if __name__ == "__main__":
    # Small batch that still exercises the multi-tile grid path and the
    # in-kernel chunk loop: 4096 rows -> 32 chunks, 2 grid tiles x 2 chunks.
    B = 4096
    key = jax.random.PRNGKey(0)
    kx, kw, kb = jax.random.split(key, 3)

    # deterministic parameters for Linear(in=2, out=3): out = x @ W + b
    W = jax.random.normal(kw, (2, 3), dtype=jnp.float32) * 0.5
    b = jax.random.normal(kb, (1, 3), dtype=jnp.float32) * 0.1

    # initial program state: random position/features, step counter (col 5) = 0
    x = jax.random.normal(kx, (B, D), dtype=jnp.float32)
    x = x.at[:, 5].set(0.0)

    out = program_forward(x, W, b, block_chunks=16)
    out = jax.block_until_ready(out)

    ref = jax.block_until_ready(program_forward_ref(x, W, b))
    np.testing.assert_allclose(np.asarray(out), np.asarray(ref),
                               rtol=1e-5, atol=1e-5)
    print("KERNEL_OK")
</pallas_src>

<mosaic_0001>
module attributes {stable_mosaic.version = 11 : i64} {
  func.func @_program_kernel(%arg0: i32, %arg1: memref<2x3xf32, #tpu.memory_space<smem>>, %arg2: memref<1x3xf32, #tpu.memory_space<smem>>, %arg3: memref<9x16x128xf32, #tpu.memory_space<vmem>>, %arg4: memref<9x16x128xf32, #tpu.memory_space<vmem>>) attributes {dimension_semantics = [#tpu.dimension_semantics<parallel>], iteration_bounds = array<i64: 2>, scalar_prefetch = 0 : i64, scratch_operands = 0 : i64, tpu.core_type = #tpu.core_type<tc>, window_params = [{transform_indices = @transform_0, window_bounds = array<i64: 2, 3>}, {transform_indices = @transform_1, window_bounds = array<i64: 1, 3>}, {transform_indices = @transform_2, window_bounds = array<i64: 9, 16, 128>}, {transform_indices = @transform_3, window_bounds = array<i64: 9, 16, 128>}]} {
    %c0 = arith.constant 0 : index
    %c0_0 = arith.constant 0 : index
    %0 = memref.load %arg1[%c0, %c0_0] : memref<2x3xf32, #tpu.memory_space<smem>>
    %1 = vector.broadcast %0 : f32 to vector<8x128xf32>
    %c0_1 = arith.constant 0 : index
    %c1 = arith.constant 1 : index
    %2 = memref.load %arg1[%c0_1, %c1] : memref<2x3xf32, #tpu.memory_space<smem>>
    %3 = vector.broadcast %2 : f32 to vector<8x128xf32>
    %c0_2 = arith.constant 0 : index
    %c2 = arith.constant 2 : index
    %4 = memref.load %arg1[%c0_2, %c2] : memref<2x3xf32, #tpu.memory_space<smem>>
    %5 = vector.broadcast %4 : f32 to vector<8x128xf32>
    %c1_3 = arith.constant 1 : index
    %c0_4 = arith.constant 0 : index
    %6 = memref.load %arg1[%c1_3, %c0_4] : memref<2x3xf32, #tpu.memory_space<smem>>
    %7 = vector.broadcast %6 : f32 to vector<8x128xf32>
    %c1_5 = arith.constant 1 : index
    %c1_6 = arith.constant 1 : index
    %8 = memref.load %arg1[%c1_5, %c1_6] : memref<2x3xf32, #tpu.memory_space<smem>>
    %9 = vector.broadcast %8 : f32 to vector<8x128xf32>
    %c1_7 = arith.constant 1 : index
    %c2_8 = arith.constant 2 : index
    %10 = memref.load %arg1[%c1_7, %c2_8] : memref<2x3xf32, #tpu.memory_space<smem>>
    %11 = vector.broadcast %10 : f32 to vector<8x128xf32>
    %c0_9 = arith.constant 0 : index
    %c0_10 = arith.constant 0 : index
    %12 = memref.load %arg2[%c0_9, %c0_10] : memref<1x3xf32, #tpu.memory_space<smem>>
    %13 = vector.broadcast %12 : f32 to vector<8x128xf32>
    %c0_11 = arith.constant 0 : index
    %c1_12 = arith.constant 1 : index
    %14 = memref.load %arg2[%c0_11, %c1_12] : memref<1x3xf32, #tpu.memory_space<smem>>
    %15 = vector.broadcast %14 : f32 to vector<8x128xf32>
    %c0_13 = arith.constant 0 : index
    %c2_14 = arith.constant 2 : index
    %16 = memref.load %arg2[%c0_13, %c2_14] : memref<1x3xf32, #tpu.memory_space<smem>>
    %17 = vector.broadcast %16 : f32 to vector<8x128xf32>
    %c0_i32 = arith.constant 0 : i32
    %c2_i32 = arith.constant 2 : i32
    %18 = arith.addi %c0_i32, %c2_i32 : i32
    %c1_i32 = arith.constant 1 : i32
    scf.for %arg5 = %c0_i32 to %18 step %c1_i32  : i32 {
      %c1_i32_16 = arith.constant 1 : i32
      %19 = arith.muli %arg5, %c1_i32_16 : i32
      %c0_i32_17 = arith.constant 0 : i32
      %20 = arith.addi %c0_i32_17, %19 : i32
      %c8_i32 = arith.constant 8 : i32
      %21 = arith.muli %20, %c8_i32 : i32
      %22 = tpu.assume_multiple %21, 8 : i32
      %c0_18 = arith.constant 0 : index
      %23 = arith.index_cast %22 : i32 to index
      %c0_19 = arith.constant 0 : index
      %24 = vector.load %arg3[%c0_18, %23, %c0_19] : memref<9x16x128xf32, #tpu.memory_space<vmem>>, vector<1x8x128xf32>
      %25 = vector.shape_cast %24 : vector<1x8x128xf32> to vector<8x128xf32>
      %c1_20 = arith.constant 1 : index
      %26 = arith.index_cast %22 : i32 to index
      %c0_21 = arith.constant 0 : index
      %27 = vector.load %arg3[%c1_20, %26, %c0_21] : memref<9x16x128xf32, #tpu.memory_space<vmem>>, vector<1x8x128xf32>
      %28 = vector.shape_cast %27 : vector<1x8x128xf32> to vector<8x128xf32>
      %c2_22 = arith.constant 2 : index
      %29 = arith.index_cast %22 : i32 to index
      %c0_23 = arith.constant 0 : index
      %30 = vector.load %arg3[%c2_22, %29, %c0_23] : memref<9x16x128xf32, #tpu.memory_space<vmem>>, vector<1x8x128xf32>
      %31 = vector.shape_cast %30 : vector<1x8x128xf32> to vector<8x128xf32>
      %c3 = arith.constant 3 : index
      %32 = arith.index_cast %22 : i32 to index
      %c0_24 = arith.constant 0 : index
      %33 = vector.load %arg3[%c3, %32, %c0_24] : memref<9x16x128xf32, #tpu.memory_space<vmem>>, vector<1x8x128xf32>
      %34 = vector.shape_cast %33 : vector<1x8x128xf32> to vector<8x128xf32>
      %c4 = arith.constant 4 : index
      %35 = arith.index_cast %22 : i32 to index
      %c0_25 = arith.constant 0 : index
      %36 = vector.load %arg3[%c4, %35, %c0_25] : memref<9x16x128xf32, #tpu.memory_space<vmem>>, vector<1x8x128xf32>
      %37 = vector.shape_cast %36 : vector<1x8x128xf32> to vector<8x128xf32>
      %c5 = arith.constant 5 : index
      %38 = arith.index_cast %22 : i32 to index
      %c0_26 = arith.constant 0 : index
      %39 = vector.load %arg3[%c5, %38, %c0_26] : memref<9x16x128xf32, #tpu.memory_space<vmem>>, vector<1x8x128xf32>
      %40 = vector.shape_cast %39 : vector<1x8x128xf32> to vector<8x128xf32>
      %c6 = arith.constant 6 : index
      %41 = arith.index_cast %22 : i32 to index
      %c0_27 = arith.constant 0 : index
      %42 = vector.load %arg3[%c6, %41, %c0_27] : memref<9x16x128xf32, #tpu.memory_space<vmem>>, vector<1x8x128xf32>
      %43 = vector.shape_cast %42 : vector<1x8x128xf32> to vector<8x128xf32>
      %c7 = arith.constant 7 : index
      %44 = arith.index_cast %22 : i32 to index
      %c0_28 = arith.constant 0 : index
      %45 = vector.load %arg3[%c7, %44, %c0_28] : memref<9x16x128xf32, #tpu.memory_space<vmem>>, vector<1x8x128xf32>
      %46 = vector.shape_cast %45 : vector<1x8x128xf32> to vector<8x128xf32>
      %c8 = arith.constant 8 : index
      %47 = arith.index_cast %22 : i32 to index
      %c0_29 = arith.constant 0 : index
      %48 = vector.load %arg3[%c8, %47, %c0_29] : memref<9x16x128xf32, #tpu.memory_space<vmem>>, vector<1x8x128xf32>
      %49 = vector.shape_cast %48 : vector<1x8x128xf32> to vector<8x128xf32>
      %c0_i32_30 = arith.constant 0 : i32
      %cst = arith.constant 1.900000e+01 : f32
      %50 = vector.broadcast %cst : f32 to vector<8x128xf32>
      %51 = arith.cmpf olt, %40, %50 : vector<8x128xf32>
      %52 = arith.extui %51 : vector<8x128xi1> to vector<8x128xi32>
      %53 = arith.sitofp %52 : vector<8x128xi32> to vector<8x128xf32>
      %54 = arith.mulf %25, %1 : vector<8x128xf32>
      %55 = arith.mulf %28, %7 : vector<8x128xf32>
      %56 = arith.addf %54, %55 : vector<8x128xf32>
      %57 = arith.addf %56, %13 : vector<8x128xf32>
      %58 = arith.mulf %25, %3 : vector<8x128xf32>
      %59 = arith.mulf %28, %9 : vector<8x128xf32>
      %60 = arith.addf %58, %59 : vector<8x128xf32>
      %61 = arith.addf %60, %15 : vector<8x128xf32>
      %62 = arith.mulf %25, %5 : vector<8x128xf32>
      %63 = arith.mulf %28, %11 : vector<8x128xf32>
      %64 = arith.addf %62, %63 : vector<8x128xf32>
      %65 = arith.addf %64, %17 : vector<8x128xf32>
      %66 = arith.subf %61, %57 : vector<8x128xf32>
      %67 = arith.subf %65, %57 : vector<8x128xf32>
      %68 = arith.subf %65, %61 : vector<8x128xf32>
      %cst_31 = arith.constant 0.000000e+00 : f32
      %69 = vector.broadcast %cst_31 : f32 to vector<8x128xf32>
      %70 = arith.cmpf ole, %67, %69 : vector<8x128xf32>
      %cst_32 = arith.constant -1.000000e+00 : f32
      %cst_33 = arith.constant 1.000000e+00 : f32
      %71 = vector.broadcast %cst_32 : f32 to vector<8x128xf32>
      %72 = vector.broadcast %cst_33 : f32 to vector<8x128xf32>
      %73 = arith.select %70, %71, %72 : vector<8x128xi1>, vector<8x128xf32>
      %cst_34 = arith.constant 0.000000e+00 : f32
      %74 = vector.broadcast %cst_34 : f32 to vector<8x128xf32>
      %75 = arith.cmpf ole, %68, %74 : vector<8x128xf32>
      %cst_35 = arith.constant 0.000000e+00 : f32
      %cst_36 = arith.constant 1.000000e+00 : f32
      %76 = vector.broadcast %cst_35 : f32 to vector<8x128xf32>
      %77 = vector.broadcast %cst_36 : f32 to vector<8x128xf32>
      %78 = arith.select %75, %76, %77 : vector<8x128xi1>, vector<8x128xf32>
      %cst_37 = arith.constant 0.000000e+00 : f32
      %79 = vector.broadcast %cst_37 : f32 to vector<8x128xf32>
      %80 = arith.cmpf ole, %66, %79 : vector<8x128xf32>
      %81 = arith.select %80, %73, %78 : vector<8x128xi1>, vector<8x128xf32>
      %82 = arith.mulf %81, %53 : vector<8x128xf32>
      %83 = arith.addf %25, %82 : vector<8x128xf32>
      %84 = arith.addf %28, %53 : vector<8x128xf32>
      %85 = arith.addf %40, %53 : vector<8x128xf32>
      %86 = arith.select %51, %57, %31 : vector<8x128xi1>, vector<8x128xf32>
      %87 = arith.select %51, %61, %34 : vector<8x128xi1>, vector<8x128xf32>
      %88 = arith.select %51, %65, %37 : vector<8x128xi1>, vector<8x128xf32>
      %89 = arith.select %51, %66, %43 : vector<8x128xi1>, vector<8x128xf32>
      %90 = arith.select %51, %67, %46 : vector<8x128xi1>, vector<8x128xf32>
      %91 = arith.select %51, %68, %49 : vector<8x128xi1>, vector<8x128xf32>
      %c1_i32_38 = arith.constant 1 : i32
      %cst_39 = arith.constant 1.900000e+01 : f32
      %92 = vector.broadcast %cst_39 : f32 to vector<8x128xf32>
      %93 = arith.cmpf olt, %85, %92 : vector<8x128xf32>
      %94 = arith.extui %93 : vector<8x128xi1> to vector<8x128xi32>
      %95 = arith.sitofp %94 : vector<8x128xi32> to vector<8x128xf32>
      %96 = arith.mulf %83, %1 : vector<8x128xf32>
      %97 = arith.mulf %84, %7 : vector<8x128xf32>
      %98 = arith.addf %96, %97 : vector<8x128xf32>
      %99 = arith.addf %98, %13 : vector<8x128xf32>
      %100 = arith.mulf %83, %3 : vector<8x128xf32>
      %101 = arith.mulf %84, %9 : vector<8x128xf32>
      %102 = arith.addf %100, %101 : vector<8x128xf32>
      %103 = arith.addf %102, %15 : vector<8x128xf32>
      %104 = arith.mulf %83, %5 : vector<8x128xf32>
      %105 = arith.mulf %84, %11 : vector<8x128xf32>
      %106 = arith.addf %104, %105 : vector<8x128xf32>
      %107 = arith.addf %106, %17 : vector<8x128xf32>
      %108 = arith.subf %103, %99 : vector<8x128xf32>
      %109 = arith.subf %107, %99 : vector<8x128xf32>
      %110 = arith.subf %107, %103 : vector<8x128xf32>
      %cst_40 = arith.constant 0.000000e+00 : f32
      %111 = vector.broadcast %cst_40 : f32 to vector<8x128xf32>
      %112 = arith.cmpf ole, %109, %111 : vector<8x128xf32>
      %cst_41 = arith.constant -1.000000e+00 : f32
      %cst_42 = arith.constant 1.000000e+00 : f32
      %113 = vector.broadcast %cst_41 : f32 to vector<8x128xf32>
      %114 = vector.broadcast %cst_42 : f32 to vector<8x128xf32>
      %115 = arith.select %112, %113, %114 : vector<8x128xi1>, vector<8x128xf32>
      %cst_43 = arith.constant 0.000000e+00 : f32
      %116 = vector.broadcast %cst_43 : f32 to vector<8x128xf32>
      %117 = arith.cmpf ole, %110, %116 : vector<8x128xf32>
      %cst_44 = arith.constant 0.000000e+00 : f32
      %cst_45 = arith.constant 1.000000e+00 : f32
      %118 = vector.broadcast %cst_44 : f32 to vector<8x128xf32>
      %119 = vector.broadcast %cst_45 : f32 to vector<8x128xf32>
      %120 = arith.select %117, %118, %119 : vector<8x128xi1>, vector<8x128xf32>
      %cst_46 = arith.constant 0.000000e+00 : f32
      %121 = vector.broadcast %cst_46 : f32 to vector<8x128xf32>
      %122 = arith.cmpf ole, %108, %121 : vector<8x128xf32>
      %123 = arith.select %122, %115, %120 : vector<8x128xi1>, vector<8x128xf32>
      %124 = arith.mulf %123, %95 : vector<8x128xf32>
      %125 = arith.addf %83, %124 : vector<8x128xf32>
      %126 = arith.addf %84, %95 : vector<8x128xf32>
      %127 = arith.addf %85, %95 : vector<8x128xf32>
      %128 = arith.select %93, %99, %86 : vector<8x128xi1>, vector<8x128xf32>
      %129 = arith.select %93, %103, %87 : vector<8x128xi1>, vector<8x128xf32>
      %130 = arith.select %93, %107, %88 : vector<8x128xi1>, vector<8x128xf32>
      %131 = arith.select %93, %108, %89 : vector<8x128xi1>, vector<8x128xf32>
      %132 = arith.select %93, %109, %90 : vector<8x128xi1>, vector<8x128xf32>
      %133 = arith.select %93, %110, %91 : vector<8x128xi1>, vector<8x128xf32>
      %c2_i32_47 = arith.constant 2 : i32
      %cst_48 = arith.constant 1.900000e+01 : f32
      %134 = vector.broadcast %cst_48 : f32 to vector<8x128xf32>
      %135 = arith.cmpf olt, %127, %134 : vector<8x128xf32>
      %136 = arith.extui %135 : vector<8x128xi1> to vector<8x128xi32>
      %137 = arith.sitofp %136 : vector<8x128xi32> to vector<8x128xf32>
      %138 = arith.mulf %125, %1 : vector<8x128xf32>
      %139 = arith.mulf %126, %7 : vector<8x128xf32>
      %140 = arith.addf %138, %139 : vector<8x128xf32>
      %141 = arith.addf %140, %13 : vector<8x128xf32>
      %142 = arith.mulf %125, %3 : vector<8x128xf32>
      %143 = arith.mulf %126, %9 : vector<8x128xf32>
      %144 = arith.addf %142, %143 : vector<8x128xf32>
      %145 = arith.addf %144, %15 : vector<8x128xf32>
      %146 = arith.mulf %125, %5 : vector<8x128xf32>
      %147 = arith.mulf %126, %11 : vector<8x128xf32>
      %148 = arith.addf %146, %147 : vector<8x128xf32>
      %149 = arith.addf %148, %17 : vector<8x128xf32>
      %150 = arith.subf %145, %141 : vector<8x128xf32>
      %151 = arith.subf %149, %141 : vector<8x128xf32>
      %152 = arith.subf %149, %145 : vector<8x128xf32>
      %cst_49 = arith.constant 0.000000e+00 : f32
      %153 = vector.broadcast %cst_49 : f32 to vector<8x128xf32>
      %154 = arith.cmpf ole, %151, %153 : vector<8x128xf32>
      %cst_50 = arith.constant -1.000000e+00 : f32
      %cst_51 = arith.constant 1.000000e+00 : f32
      %155 = vector.broadcast %cst_50 : f32 to vector<8x128xf32>
      %156 = vector.broadcast %cst_51 : f32 to vector<8x128xf32>
      %157 = arith.select %154, %155, %156 : vector<8x128xi1>, vector<8x128xf32>
      %cst_52 = arith.constant 0.000000e+00 : f32
      %158 = vector.broadcast %cst_52 : f32 to vector<8x128xf32>
      %159 = arith.cmpf ole, %152, %158 : vector<8x128xf32>
      %cst_53 = arith.constant 0.000000e+00 : f32
      %cst_54 = arith.constant 1.000000e+00 : f32
      %160 = vector.broadcast %cst_53 : f32 to vector<8x128xf32>
      %161 = vector.broadcast %cst_54 : f32 to vector<8x128xf32>
      %162 = arith.select %159, %160, %161 : vector<8x128xi1>, vector<8x128xf32>
      %cst_55 = arith.constant 0.000000e+00 : f32
      %163 = vector.broadcast %cst_55 : f32 to vector<8x128xf32>
      %164 = arith.cmpf ole, %150, %163 : vector<8x128xf32>
      %165 = arith.select %164, %157, %162 : vector<8x128xi1>, vector<8x128xf32>
      %166 = arith.mulf %165, %137 : vector<8x128xf32>
      %167 = arith.addf %125, %166 : vector<8x128xf32>
      %168 = arith.addf %126, %137 : vector<8x128xf32>
      %169 = arith.addf %127, %137 : vector<8x128xf32>
      %170 = arith.select %135, %141, %128 : vector<8x128xi1>, vector<8x128xf32>
      %171 = arith.select %135, %145, %129 : vector<8x128xi1>, vector<8x128xf32>
      %172 = arith.select %135, %149, %130 : vector<8x128xi1>, vector<8x128xf32>
      %173 = arith.select %135, %150, %131 : vector<8x128xi1>, vector<8x128xf32>
      %174 = arith.select %135, %151, %132 : vector<8x128xi1>, vector<8x128xf32>
      %175 = arith.select %135, %152, %133 : vector<8x128xi1>, vector<8x128xf32>
      %c3_i32 = arith.constant 3 : i32
      %cst_56 = arith.constant 1.900000e+01 : f32
      %176 = vector.broadcast %cst_56 : f32 to vector<8x128xf32>
      %177 = arith.cmpf olt, %169, %176 : vector<8x128xf32>
      %178 = arith.extui %177 : vector<8x128xi1> to vector<8x128xi32>
      %179 = arith.sitofp %178 : vector<8x128xi32> to vector<8x128xf32>
      %180 = arith.mulf %167, %1 : vector<8x128xf32>
      %181 = arith.mulf %168, %7 : vector<8x128xf32>
      %182 = arith.addf %180, %181 : vector<8x128xf32>
      %183 = arith.addf %182, %13 : vector<8x128xf32>
      %184 = arith.mulf %167, %3 : vector<8x128xf32>
      %185 = arith.mulf %168, %9 : vector<8x128xf32>
      %186 = arith.addf %184, %185 : vector<8x128xf32>
      %187 = arith.addf %186, %15 : vector<8x128xf32>
      %188 = arith.mulf %167, %5 : vector<8x128xf32>
      %189 = arith.mulf %168, %11 : vector<8x128xf32>
      %190 = arith.addf %188, %189 : vector<8x128xf32>
      %191 = arith.addf %190, %17 : vector<8x128xf32>
      %192 = arith.subf %187, %183 : vector<8x128xf32>
      %193 = arith.subf %191, %183 : vector<8x128xf32>
      %194 = arith.subf %191, %187 : vector<8x128xf32>
      %cst_57 = arith.constant 0.000000e+00 : f32
      %195 = vector.broadcast %cst_57 : f32 to vector<8x128xf32>
      %196 = arith.cmpf ole, %193, %195 : vector<8x128xf32>
      %cst_58 = arith.constant -1.000000e+00 : f32
      %cst_59 = arith.constant 1.000000e+00 : f32
      %197 = vector.broadcast %cst_58 : f32 to vector<8x128xf32>
      %198 = vector.broadcast %cst_59 : f32 to vector<8x128xf32>
      %199 = arith.select %196, %197, %198 : vector<8x128xi1>, vector<8x128xf32>
      %cst_60 = arith.constant 0.000000e+00 : f32
      %200 = vector.broadcast %cst_60 : f32 to vector<8x128xf32>
      %201 = arith.cmpf ole, %194, %200 : vector<8x128xf32>
      %cst_61 = arith.constant 0.000000e+00 : f32
      %cst_62 = arith.constant 1.000000e+00 : f32
      %202 = vector.broadcast %cst_61 : f32 to vector<8x128xf32>
      %203 = vector.broadcast %cst_62 : f32 to vector<8x128xf32>
      %204 = arith.select %201, %202, %203 : vector<8x128xi1>, vector<8x128xf32>
      %cst_63 = arith.constant 0.000000e+00 : f32
      %205 = vector.broadcast %cst_63 : f32 to vector<8x128xf32>
      %206 = arith.cmpf ole, %192, %205 : vector<8x128xf32>
      %207 = arith.select %206, %199, %204 : vector<8x128xi1>, vector<8x128xf32>
      %208 = arith.mulf %207, %179 : vector<8x128xf32>
      %209 = arith.addf %167, %208 : vector<8x128xf32>
      %210 = arith.addf %168, %179 : vector<8x128xf32>
      %211 = arith.addf %169, %179 : vector<8x128xf32>
      %212 = arith.select %177, %183, %170 : vector<8x128xi1>, vector<8x128xf32>
      %213 = arith.select %177, %187, %171 : vector<8x128xi1>, vector<8x128xf32>
      %214 = arith.select %177, %191, %172 : vector<8x128xi1>, vector<8x128xf32>
      %215 = arith.select %177, %192, %173 : vector<8x128xi1>, vector<8x128xf32>
      %216 = arith.select %177, %193, %174 : vector<8x128xi1>, vector<8x128xf32>
      %217 = arith.select %177, %194, %175 : vector<8x128xi1>, vector<8x128xf32>
      %c4_i32 = arith.constant 4 : i32
      %cst_64 = arith.constant 1.900000e+01 : f32
      %218 = vector.broadcast %cst_64 : f32 to vector<8x128xf32>
      %219 = arith.cmpf olt, %211, %218 : vector<8x128xf32>
      %220 = arith.extui %219 : vector<8x128xi1> to vector<8x128xi32>
      %221 = arith.sitofp %220 : vector<8x128xi32> to vector<8x128xf32>
      %222 = arith.mulf %209, %1 : vector<8x128xf32>
      %223 = arith.mulf %210, %7 : vector<8x128xf32>
      %224 = arith.addf %222, %223 : vector<8x128xf32>
      %225 = arith.addf %224, %13 : vector<8x128xf32>
      %226 = arith.mulf %209, %3 : vector<8x128xf32>
      %227 = arith.mulf %210, %9 : vector<8x128xf32>
      %228 = arith.addf %226, %227 : vector<8x128xf32>
      %229 = arith.addf %228, %15 : vector<8x128xf32>
      %230 = arith.mulf %209, %5 : vector<8x128xf32>
      %231 = arith.mulf %210, %11 : vector<8x128xf32>
      %232 = arith.addf %230, %231 : vector<8x128xf32>
      %233 = arith.addf %232, %17 : vector<8x128xf32>
      %234 = arith.subf %229, %225 : vector<8x128xf32>
      %235 = arith.subf %233, %225 : vector<8x128xf32>
      %236 = arith.subf %233, %229 : vector<8x128xf32>
      %cst_65 = arith.constant 0.000000e+00 : f32
      %237 = vector.broadcast %cst_65 : f32 to vector<8x128xf32>
      %238 = arith.cmpf ole, %235, %237 : vector<8x128xf32>
      %cst_66 = arith.constant -1.000000e+00 : f32
      %cst_67 = arith.constant 1.000000e+00 : f32
      %239 = vector.broadcast %cst_66 : f32 to vector<8x128xf32>
      %240 = vector.broadcast %cst_67 : f32 to vector<8x128xf32>
      %241 = arith.select %238, %239, %240 : vector<8x128xi1>, vector<8x128xf32>
      %cst_68 = arith.constant 0.000000e+00 : f32
      %242 = vector.broadcast %cst_68 : f32 to vector<8x128xf32>
      %243 = arith.cmpf ole, %236, %242 : vector<8x128xf32>
      %cst_69 = arith.constant 0.000000e+00 : f32
      %cst_70 = arith.constant 1.000000e+00 : f32
      %244 = vector.broadcast %cst_69 : f32 to vector<8x128xf32>
      %245 = vector.broadcast %cst_70 : f32 to vector<8x128xf32>
      %246 = arith.select %243, %244, %245 : vector<8x128xi1>, vector<8x128xf32>
      %cst_71 = arith.constant 0.000000e+00 : f32
      %247 = vector.broadcast %cst_71 : f32 to vector<8x128xf32>
      %248 = arith.cmpf ole, %234, %247 : vector<8x128xf32>
      %249 = arith.select %248, %241, %246 : vector<8x128xi1>, vector<8x128xf32>
      %250 = arith.mulf %249, %221 : vector<8x128xf32>
      %251 = arith.addf %209, %250 : vector<8x128xf32>
      %252 = arith.addf %210, %221 : vector<8x128xf32>
      %253 = arith.addf %211, %221 : vector<8x128xf32>
      %254 = arith.select %219, %225, %212 : vector<8x128xi1>, vector<8x128xf32>
      %255 = arith.select %219, %229, %213 : vector<8x128xi1>, vector<8x128xf32>
      %256 = arith.select %219, %233, %214 : vector<8x128xi1>, vector<8x128xf32>
      %257 = arith.select %219, %234, %215 : vector<8x128xi1>, vector<8x128xf32>
      %258 = arith.select %219, %235, %216 : vector<8x128xi1>, vector<8x128xf32>
      %259 = arith.select %219, %236, %217 : vector<8x128xi1>, vector<8x128xf32>
      %c5_i32 = arith.constant 5 : i32
      %cst_72 = arith.constant 1.900000e+01 : f32
      %260 = vector.broadcast %cst_72 : f32 to vector<8x128xf32>
      %261 = arith.cmpf olt, %253, %260 : vector<8x128xf32>
      %262 = arith.extui %261 : vector<8x128xi1> to vector<8x128xi32>
      %263 = arith.sitofp %262 : vector<8x128xi32> to vector<8x128xf32>
      %264 = arith.mulf %251, %1 : vector<8x128xf32>
      %265 = arith.mulf %252, %7 : vector<8x128xf32>
      %266 = arith.addf %264, %265 : vector<8x128xf32>
      %267 = arith.addf %266, %13 : vector<8x128xf32>
      %268 = arith.mulf %251, %3 : vector<8x128xf32>
      %269 = arith.mulf %252, %9 : vector<8x128xf32>
      %270 = arith.addf %268, %269 : vector<8x128xf32>
      %271 = arith.addf %270, %15 : vector<8x128xf32>
      %272 = arith.mulf %251, %5 : vector<8x128xf32>
      %273 = arith.mulf %252, %11 : vector<8x128xf32>
      %274 = arith.addf %272, %273 : vector<8x128xf32>
      %275 = arith.addf %274, %17 : vector<8x128xf32>
      %276 = arith.subf %271, %267 : vector<8x128xf32>
      %277 = arith.subf %275, %267 : vector<8x128xf32>
      %278 = arith.subf %275, %271 : vector<8x128xf32>
      %cst_73 = arith.constant 0.000000e+00 : f32
      %279 = vector.broadcast %cst_73 : f32 to vector<8x128xf32>
      %280 = arith.cmpf ole, %277, %279 : vector<8x128xf32>
      %cst_74 = arith.constant -1.000000e+00 : f32
      %cst_75 = arith.constant 1.000000e+00 : f32
      %281 = vector.broadcast %cst_74 : f32 to vector<8x128xf32>
      %282 = vector.broadcast %cst_75 : f32 to vector<8x128xf32>
      %283 = arith.select %280, %281, %282 : vector<8x128xi1>, vector<8x128xf32>
      %cst_76 = arith.constant 0.000000e+00 : f32
      %284 = vector.broadcast %cst_76 : f32 to vector<8x128xf32>
      %285 = arith.cmpf ole, %278, %284 : vector<8x128xf32>
      %cst_77 = arith.constant 0.000000e+00 : f32
      %cst_78 = arith.constant 1.000000e+00 : f32
      %286 = vector.broadcast %cst_77 : f32 to vector<8x128xf32>
      %287 = vector.broadcast %cst_78 : f32 to vector<8x128xf32>
      %288 = arith.select %285, %286, %287 : vector<8x128xi1>, vector<8x128xf32>
      %cst_79 = arith.constant 0.000000e+00 : f32
      %289 = vector.broadcast %cst_79 : f32 to vector<8x128xf32>
      %290 = arith.cmpf ole, %276, %289 : vector<8x128xf32>
      %291 = arith.select %290, %283, %288 : vector<8x128xi1>, vector<8x128xf32>
      %292 = arith.mulf %291, %263 : vector<8x128xf32>
      %293 = arith.addf %251, %292 : vector<8x128xf32>
      %294 = arith.addf %252, %263 : vector<8x128xf32>
      %295 = arith.addf %253, %263 : vector<8x128xf32>
      %296 = arith.select %261, %267, %254 : vector<8x128xi1>, vector<8x128xf32>
      %297 = arith.select %261, %271, %255 : vector<8x128xi1>, vector<8x128xf32>
      %298 = arith.select %261, %275, %256 : vector<8x128xi1>, vector<8x128xf32>
      %299 = arith.select %261, %276, %257 : vector<8x128xi1>, vector<8x128xf32>
      %300 = arith.select %261, %277, %258 : vector<8x128xi1>, vector<8x128xf32>
      %301 = arith.select %261, %278, %259 : vector<8x128xi1>, vector<8x128xf32>
      %c6_i32 = arith.constant 6 : i32
      %cst_80 = arith.constant 1.900000e+01 : f32
      %302 = vector.broadcast %cst_80 : f32 to vector<8x128xf32>
      %303 = arith.cmpf olt, %295, %302 : vector<8x128xf32>
      %304 = arith.extui %303 : vector<8x128xi1> to vector<8x128xi32>
      %305 = arith.sitofp %304 : vector<8x128xi32> to vector<8x128xf32>
      %306 = arith.mulf %293, %1 : vector<8x128xf32>
      %307 = arith.mulf %294, %7 : vector<8x128xf32>
      %308 = arith.addf %306, %307 : vector<8x128xf32>
      %309 = arith.addf %308, %13 : vector<8x128xf32>
      %310 = arith.mulf %293, %3 : vector<8x128xf32>
      %311 = arith.mulf %294, %9 : vector<8x128xf32>
      %312 = arith.addf %310, %311 : vector<8x128xf32>
      %313 = arith.addf %312, %15 : vector<8x128xf32>
      %314 = arith.mulf %293, %5 : vector<8x128xf32>
      %315 = arith.mulf %294, %11 : vector<8x128xf32>
      %316 = arith.addf %314, %315 : vector<8x128xf32>
      %317 = arith.addf %316, %17 : vector<8x128xf32>
      %318 = arith.subf %313, %309 : vector<8x128xf32>
      %319 = arith.subf %317, %309 : vector<8x128xf32>
      %320 = arith.subf %317, %313 : vector<8x128xf32>
      %cst_81 = arith.constant 0.000000e+00 : f32
      %321 = vector.broadcast %cst_81 : f32 to vector<8x128xf32>
      %322 = arith.cmpf ole, %319, %321 : vector<8x128xf32>
      %cst_82 = arith.constant -1.000000e+00 : f32
      %cst_83 = arith.constant 1.000000e+00 : f32
      %323 = vector.broadcast %cst_82 : f32 to vector<8x128xf32>
      %324 = vector.broadcast %cst_83 : f32 to vector<8x128xf32>
      %325 = arith.select %322, %323, %324 : vector<8x128xi1>, vector<8x128xf32>
      %cst_84 = arith.constant 0.000000e+00 : f32
      %326 = vector.broadcast %cst_84 : f32 to vector<8x128xf32>
      %327 = arith.cmpf ole, %320, %326 : vector<8x128xf32>
      %cst_85 = arith.constant 0.000000e+00 : f32
      %cst_86 = arith.constant 1.000000e+00 : f32
      %328 = vector.broadcast %cst_85 : f32 to vector<8x128xf32>
      %329 = vector.broadcast %cst_86 : f32 to vector<8x128xf32>
      %330 = arith.select %327, %328, %329 : vector<8x128xi1>, vector<8x128xf32>
      %cst_87 = arith.constant 0.000000e+00 : f32
      %331 = vector.broadcast %cst_87 : f32 to vector<8x128xf32>
      %332 = arith.cmpf ole, %318, %331 : vector<8x128xf32>
      %333 = arith.select %332, %325, %330 : vector<8x128xi1>, vector<8x128xf32>
      %334 = arith.mulf %333, %305 : vector<8x128xf32>
      %335 = arith.addf %293, %334 : vector<8x128xf32>
      %336 = arith.addf %294, %305 : vector<8x128xf32>
      %337 = arith.addf %295, %305 : vector<8x128xf32>
      %338 = arith.select %303, %309, %296 : vector<8x128xi1>, vector<8x128xf32>
      %339 = arith.select %303, %313, %297 : vector<8x128xi1>, vector<8x128xf32>
      %340 = arith.select %303, %317, %298 : vector<8x128xi1>, vector<8x128xf32>
      %341 = arith.select %303, %318, %299 : vector<8x128xi1>, vector<8x128xf32>
      %342 = arith.select %303, %319, %300 : vector<8x128xi1>, vector<8x128xf32>
      %343 = arith.select %303, %320, %301 : vector<8x128xi1>, vector<8x128xf32>
      %c7_i32 = arith.constant 7 : i32
      %cst_88 = arith.constant 1.900000e+01 : f32
      %344 = vector.broadcast %cst_88 : f32 to vector<8x128xf32>
      %345 = arith.cmpf olt, %337, %344 : vector<8x128xf32>
      %346 = arith.extui %345 : vector<8x128xi1> to vector<8x128xi32>
      %347 = arith.sitofp %346 : vector<8x128xi32> to vector<8x128xf32>
      %348 = arith.mulf %335, %1 : vector<8x128xf32>
      %349 = arith.mulf %336, %7 : vector<8x128xf32>
      %350 = arith.addf %348, %349 : vector<8x128xf32>
      %351 = arith.addf %350, %13 : vector<8x128xf32>
      %352 = arith.mulf %335, %3 : vector<8x128xf32>
      %353 = arith.mulf %336, %9 : vector<8x128xf32>
      %354 = arith.addf %352, %353 : vector<8x128xf32>
      %355 = arith.addf %354, %15 : vector<8x128xf32>
      %356 = arith.mulf %335, %5 : vector<8x128xf32>
      %357 = arith.mulf %336, %11 : vector<8x128xf32>
      %358 = arith.addf %356, %357 : vector<8x128xf32>
      %359 = arith.addf %358, %17 : vector<8x128xf32>
      %360 = arith.subf %355, %351 : vector<8x128xf32>
      %361 = arith.subf %359, %351 : vector<8x128xf32>
      %362 = arith.subf %359, %355 : vector<8x128xf32>
      %cst_89 = arith.constant 0.000000e+00 : f32
      %363 = vector.broadcast %cst_89 : f32 to vector<8x128xf32>
      %364 = arith.cmpf ole, %361, %363 : vector<8x128xf32>
      %cst_90 = arith.constant -1.000000e+00 : f32
      %cst_91 = arith.constant 1.000000e+00 : f32
      %365 = vector.broadcast %cst_90 : f32 to vector<8x128xf32>
      %366 = vector.broadcast %cst_91 : f32 to vector<8x128xf32>
      %367 = arith.select %364, %365, %366 : vector<8x128xi1>, vector<8x128xf32>
      %cst_92 = arith.constant 0.000000e+00 : f32
      %368 = vector.broadcast %cst_92 : f32 to vector<8x128xf32>
      %369 = arith.cmpf ole, %362, %368 : vector<8x128xf32>
      %cst_93 = arith.constant 0.000000e+00 : f32
      %cst_94 = arith.constant 1.000000e+00 : f32
      %370 = vector.broadcast %cst_93 : f32 to vector<8x128xf32>
      %371 = vector.broadcast %cst_94 : f32 to vector<8x128xf32>
      %372 = arith.select %369, %370, %371 : vector<8x128xi1>, vector<8x128xf32>
      %cst_95 = arith.constant 0.000000e+00 : f32
      %373 = vector.broadcast %cst_95 : f32 to vector<8x128xf32>
      %374 = arith.cmpf ole, %360, %373 : vector<8x128xf32>
      %375 = arith.select %374, %367, %372 : vector<8x128xi1>, vector<8x128xf32>
      %376 = arith.mulf %375, %347 : vector<8x128xf32>
      %377 = arith.addf %335, %376 : vector<8x128xf32>
      %378 = arith.addf %336, %347 : vector<8x128xf32>
      %379 = arith.addf %337, %347 : vector<8x128xf32>
      %380 = arith.select %345, %351, %338 : vector<8x128xi1>, vector<8x128xf32>
      %381 = arith.select %345, %355, %339 : vector<8x128xi1>, vector<8x128xf32>
      %382 = arith.select %345, %359, %340 : vector<8x128xi1>, vector<8x128xf32>
      %383 = arith.select %345, %360, %341 : vector<8x128xi1>, vector<8x128xf32>
      %384 = arith.select %345, %361, %342 : vector<8x128xi1>, vector<8x128xf32>
      %385 = arith.select %345, %362, %343 : vector<8x128xi1>, vector<8x128xf32>
      %c8_i32_96 = arith.constant 8 : i32
      %cst_97 = arith.constant 1.900000e+01 : f32
      %386 = vector.broadcast %cst_97 : f32 to vector<8x128xf32>
      %387 = arith.cmpf olt, %379, %386 : vector<8x128xf32>
      %388 = arith.extui %387 : vector<8x128xi1> to vector<8x128xi32>
      %389 = arith.sitofp %388 : vector<8x128xi32> to vector<8x128xf32>
      %390 = arith.mulf %377, %1 : vector<8x128xf32>
      %391 = arith.mulf %378, %7 : vector<8x128xf32>
      %392 = arith.addf %390, %391 : vector<8x128xf32>
      %393 = arith.addf %392, %13 : vector<8x128xf32>
      %394 = arith.mulf %377, %3 : vector<8x128xf32>
      %395 = arith.mulf %378, %9 : vector<8x128xf32>
      %396 = arith.addf %394, %395 : vector<8x128xf32>
      %397 = arith.addf %396, %15 : vector<8x128xf32>
      %398 = arith.mulf %377, %5 : vector<8x128xf32>
      %399 = arith.mulf %378, %11 : vector<8x128xf32>
      %400 = arith.addf %398, %399 : vector<8x128xf32>
      %401 = arith.addf %400, %17 : vector<8x128xf32>
      %402 = arith.subf %397, %393 : vector<8x128xf32>
      %403 = arith.subf %401, %393 : vector<8x128xf32>
      %404 = arith.subf %401, %397 : vector<8x128xf32>
      %cst_98 = arith.constant 0.000000e+00 : f32
      %405 = vector.broadcast %cst_98 : f32 to vector<8x128xf32>
      %406 = arith.cmpf ole, %403, %405 : vector<8x128xf32>
      %cst_99 = arith.constant -1.000000e+00 : f32
      %cst_100 = arith.constant 1.000000e+00 : f32
      %407 = vector.broadcast %cst_99 : f32 to vector<8x128xf32>
      %408 = vector.broadcast %cst_100 : f32 to vector<8x128xf32>
      %409 = arith.select %406, %407, %408 : vector<8x128xi1>, vector<8x128xf32>
      %cst_101 = arith.constant 0.000000e+00 : f32
      %410 = vector.broadcast %cst_101 : f32 to vector<8x128xf32>
      %411 = arith.cmpf ole, %404, %410 : vector<8x128xf32>
      %cst_102 = arith.constant 0.000000e+00 : f32
      %cst_103 = arith.constant 1.000000e+00 : f32
      %412 = vector.broadcast %cst_102 : f32 to vector<8x128xf32>
      %413 = vector.broadcast %cst_103 : f32 to vector<8x128xf32>
      %414 = arith.select %411, %412, %413 : vector<8x128xi1>, vector<8x128xf32>
      %cst_104 = arith.constant 0.000000e+00 : f32
      %415 = vector.broadcast %cst_104 : f32 to vector<8x128xf32>
      %416 = arith.cmpf ole, %402, %415 : vector<8x128xf32>
      %417 = arith.select %416, %409, %414 : vector<8x128xi1>, vector<8x128xf32>
      %418 = arith.mulf %417, %389 : vector<8x128xf32>
      %419 = arith.addf %377, %418 : vector<8x128xf32>
      %420 = arith.addf %378, %389 : vector<8x128xf32>
      %421 = arith.addf %379, %389 : vector<8x128xf32>
      %422 = arith.select %387, %393, %380 : vector<8x128xi1>, vector<8x128xf32>
      %423 = arith.select %387, %397, %381 : vector<8x128xi1>, vector<8x128xf32>
      %424 = arith.select %387, %401, %382 : vector<8x128xi1>, vector<8x128xf32>
      %425 = arith.select %387, %402, %383 : vector<8x128xi1>, vector<8x128xf32>
      %426 = arith.select %387, %403, %384 : vector<8x128xi1>, vector<8x128xf32>
      %427 = arith.select %387, %404, %385 : vector<8x128xi1>, vector<8x128xf32>
      %c9_i32 = arith.constant 9 : i32
      %cst_105 = arith.constant 1.900000e+01 : f32
      %428 = vector.broadcast %cst_105 : f32 to vector<8x128xf32>
      %429 = arith.cmpf olt, %421, %428 : vector<8x128xf32>
      %430 = arith.extui %429 : vector<8x128xi1> to vector<8x128xi32>
      %431 = arith.sitofp %430 : vector<8x128xi32> to vector<8x128xf32>
      %432 = arith.mulf %419, %1 : vector<8x128xf32>
      %433 = arith.mulf %420, %7 : vector<8x128xf32>
      %434 = arith.addf %432, %433 : vector<8x128xf32>
      %435 = arith.addf %434, %13 : vector<8x128xf32>
      %436 = arith.mulf %419, %3 : vector<8x128xf32>
      %437 = arith.mulf %420, %9 : vector<8x128xf32>
      %438 = arith.addf %436, %437 : vector<8x128xf32>
      %439 = arith.addf %438, %15 : vector<8x128xf32>
      %440 = arith.mulf %419, %5 : vector<8x128xf32>
      %441 = arith.mulf %420, %11 : vector<8x128xf32>
      %442 = arith.addf %440, %441 : vector<8x128xf32>
      %443 = arith.addf %442, %17 : vector<8x128xf32>
      %444 = arith.subf %439, %435 : vector<8x128xf32>
      %445 = arith.subf %443, %435 : vector<8x128xf32>
      %446 = arith.subf %443, %439 : vector<8x128xf32>
      %cst_106 = arith.constant 0.000000e+00 : f32
      %447 = vector.broadcast %cst_106 : f32 to vector<8x128xf32>
      %448 = arith.cmpf ole, %445, %447 : vector<8x128xf32>
      %cst_107 = arith.constant -1.000000e+00 : f32
      %cst_108 = arith.constant 1.000000e+00 : f32
      %449 = vector.broadcast %cst_107 : f32 to vector<8x128xf32>
      %450 = vector.broadcast %cst_108 : f32 to vector<8x128xf32>
      %451 = arith.select %448, %449, %450 : vector<8x128xi1>, vector<8x128xf32>
      %cst_109 = arith.constant 0.000000e+00 : f32
      %452 = vector.broadcast %cst_109 : f32 to vector<8x128xf32>
      %453 = arith.cmpf ole, %446, %452 : vector<8x128xf32>
      %cst_110 = arith.constant 0.000000e+00 : f32
      %cst_111 = arith.constant 1.000000e+00 : f32
      %454 = vector.broadcast %cst_110 : f32 to vector<8x128xf32>
      %455 = vector.broadcast %cst_111 : f32 to vector<8x128xf32>
      %456 = arith.select %453, %454, %455 : vector<8x128xi1>, vector<8x128xf32>
      %cst_112 = arith.constant 0.000000e+00 : f32
      %457 = vector.broadcast %cst_112 : f32 to vector<8x128xf32>
      %458 = arith.cmpf ole, %444, %457 : vector<8x128xf32>
      %459 = arith.select %458, %451, %456 : vector<8x128xi1>, vector<8x128xf32>
      %460 = arith.mulf %459, %431 : vector<8x128xf32>
      %461 = arith.addf %419, %460 : vector<8x128xf32>
      %462 = arith.addf %420, %431 : vector<8x128xf32>
      %463 = arith.addf %421, %431 : vector<8x128xf32>
      %464 = arith.select %429, %435, %422 : vector<8x128xi1>, vector<8x128xf32>
      %465 = arith.select %429, %439, %423 : vector<8x128xi1>, vector<8x128xf32>
      %466 = arith.select %429, %443, %424 : vector<8x128xi1>, vector<8x128xf32>
      %467 = arith.select %429, %444, %425 : vector<8x128xi1>, vector<8x128xf32>
      %468 = arith.select %429, %445, %426 : vector<8x128xi1>, vector<8x128xf32>
      %469 = arith.select %429, %446, %427 : vector<8x128xi1>, vector<8x128xf32>
      %c10_i32 = arith.constant 10 : i32
      %cst_113 = arith.constant 1.900000e+01 : f32
      %470 = vector.broadcast %cst_113 : f32 to vector<8x128xf32>
      %471 = arith.cmpf olt, %463, %470 : vector<8x128xf32>
      %472 = arith.extui %471 : vector<8x128xi1> to vector<8x128xi32>
      %473 = arith.sitofp %472 : vector<8x128xi32> to vector<8x128xf32>
      %474 = arith.mulf %461, %1 : vector<8x128xf32>
      %475 = arith.mulf %462, %7 : vector<8x128xf32>
      %476 = arith.addf %474, %475 : vector<8x128xf32>
      %477 = arith.addf %476, %13 : vector<8x128xf32>
      %478 = arith.mulf %461, %3 : vector<8x128xf32>
      %479 = arith.mulf %462, %9 : vector<8x128xf32>
      %480 = arith.addf %478, %479 : vector<8x128xf32>
      %481 = arith.addf %480, %15 : vector<8x128xf32>
      %482 = arith.mulf %461, %5 : vector<8x128xf32>
      %483 = arith.mulf %462, %11 : vector<8x128xf32>
      %484 = arith.addf %482, %483 : vector<8x128xf32>
      %485 = arith.addf %484, %17 : vector<8x128xf32>
      %486 = arith.subf %481, %477 : vector<8x128xf32>
      %487 = arith.subf %485, %477 : vector<8x128xf32>
      %488 = arith.subf %485, %481 : vector<8x128xf32>
      %cst_114 = arith.constant 0.000000e+00 : f32
      %489 = vector.broadcast %cst_114 : f32 to vector<8x128xf32>
      %490 = arith.cmpf ole, %487, %489 : vector<8x128xf32>
      %cst_115 = arith.constant -1.000000e+00 : f32
      %cst_116 = arith.constant 1.000000e+00 : f32
      %491 = vector.broadcast %cst_115 : f32 to vector<8x128xf32>
      %492 = vector.broadcast %cst_116 : f32 to vector<8x128xf32>
      %493 = arith.select %490, %491, %492 : vector<8x128xi1>, vector<8x128xf32>
      %cst_117 = arith.constant 0.000000e+00 : f32
      %494 = vector.broadcast %cst_117 : f32 to vector<8x128xf32>
      %495 = arith.cmpf ole, %488, %494 : vector<8x128xf32>
      %cst_118 = arith.constant 0.000000e+00 : f32
      %cst_119 = arith.constant 1.000000e+00 : f32
      %496 = vector.broadcast %cst_118 : f32 to vector<8x128xf32>
      %497 = vector.broadcast %cst_119 : f32 to vector<8x128xf32>
      %498 = arith.select %495, %496, %497 : vector<8x128xi1>, vector<8x128xf32>
      %cst_120 = arith.constant 0.000000e+00 : f32
      %499 = vector.broadcast %cst_120 : f32 to vector<8x128xf32>
      %500 = arith.cmpf ole, %486, %499 : vector<8x128xf32>
      %501 = arith.select %500, %493, %498 : vector<8x128xi1>, vector<8x128xf32>
      %502 = arith.mulf %501, %473 : vector<8x128xf32>
      %503 = arith.addf %461, %502 : vector<8x128xf32>
      %504 = arith.addf %462, %473 : vector<8x128xf32>
      %505 = arith.addf %463, %473 : vector<8x128xf32>
      %506 = arith.select %471, %477, %464 : vector<8x128xi1>, vector<8x128xf32>
      %507 = arith.select %471, %481, %465 : vector<8x128xi1>, vector<8x128xf32>
      %508 = arith.select %471, %485, %466 : vector<8x128xi1>, vector<8x128xf32>
      %509 = arith.select %471, %486, %467 : vector<8x128xi1>, vector<8x128xf32>
      %510 = arith.select %471, %487, %468 : vector<8x128xi1>, vector<8x128xf32>
      %511 = arith.select %471, %488, %469 : vector<8x128xi1>, vector<8x128xf32>
      %c11_i32 = arith.constant 11 : i32
      %cst_121 = arith.constant 1.900000e+01 : f32
      %512 = vector.broadcast %cst_121 : f32 to vector<8x128xf32>
      %513 = arith.cmpf olt, %505, %512 : vector<8x128xf32>
      %514 = arith.extui %513 : vector<8x128xi1> to vector<8x128xi32>
      %515 = arith.sitofp %514 : vector<8x128xi32> to vector<8x128xf32>
      %516 = arith.mulf %503, %1 : vector<8x128xf32>
      %517 = arith.mulf %504, %7 : vector<8x128xf32>
      %518 = arith.addf %516, %517 : vector<8x128xf32>
      %519 = arith.addf %518, %13 : vector<8x128xf32>
      %520 = arith.mulf %503, %3 : vector<8x128xf32>
      %521 = arith.mulf %504, %9 : vector<8x128xf32>
      %522 = arith.addf %520, %521 : vector<8x128xf32>
      %523 = arith.addf %522, %15 : vector<8x128xf32>
      %524 = arith.mulf %503, %5 : vector<8x128xf32>
      %525 = arith.mulf %504, %11 : vector<8x128xf32>
      %526 = arith.addf %524, %525 : vector<8x128xf32>
      %527 = arith.addf %526, %17 : vector<8x128xf32>
      %528 = arith.subf %523, %519 : vector<8x128xf32>
      %529 = arith.subf %527, %519 : vector<8x128xf32>
      %530 = arith.subf %527, %523 : vector<8x128xf32>
      %cst_122 = arith.constant 0.000000e+00 : f32
      %531 = vector.broadcast %cst_122 : f32 to vector<8x128xf32>
      %532 = arith.cmpf ole, %529, %531 : vector<8x128xf32>
      %cst_123 = arith.constant -1.000000e+00 : f32
      %cst_124 = arith.constant 1.000000e+00 : f32
      %533 = vector.broadcast %cst_123 : f32 to vector<8x128xf32>
      %534 = vector.broadcast %cst_124 : f32 to vector<8x128xf32>
      %535 = arith.select %532, %533, %534 : vector<8x128xi1>, vector<8x128xf32>
      %cst_125 = arith.constant 0.000000e+00 : f32
      %536 = vector.broadcast %cst_125 : f32 to vector<8x128xf32>
      %537 = arith.cmpf ole, %530, %536 : vector<8x128xf32>
      %cst_126 = arith.constant 0.000000e+00 : f32
      %cst_127 = arith.constant 1.000000e+00 : f32
      %538 = vector.broadcast %cst_126 : f32 to vector<8x128xf32>
      %539 = vector.broadcast %cst_127 : f32 to vector<8x128xf32>
      %540 = arith.select %537, %538, %539 : vector<8x128xi1>, vector<8x128xf32>
      %cst_128 = arith.constant 0.000000e+00 : f32
      %541 = vector.broadcast %cst_128 : f32 to vector<8x128xf32>
      %542 = arith.cmpf ole, %528, %541 : vector<8x128xf32>
      %543 = arith.select %542, %535, %540 : vector<8x128xi1>, vector<8x128xf32>
      %544 = arith.mulf %543, %515 : vector<8x128xf32>
      %545 = arith.addf %503, %544 : vector<8x128xf32>
      %546 = arith.addf %504, %515 : vector<8x128xf32>
      %547 = arith.addf %505, %515 : vector<8x128xf32>
      %548 = arith.select %513, %519, %506 : vector<8x128xi1>, vector<8x128xf32>
      %549 = arith.select %513, %523, %507 : vector<8x128xi1>, vector<8x128xf32>
      %550 = arith.select %513, %527, %508 : vector<8x128xi1>, vector<8x128xf32>
      %551 = arith.select %513, %528, %509 : vector<8x128xi1>, vector<8x128xf32>
      %552 = arith.select %513, %529, %510 : vector<8x128xi1>, vector<8x128xf32>
      %553 = arith.select %513, %530, %511 : vector<8x128xi1>, vector<8x128xf32>
      %c12_i32 = arith.constant 12 : i32
      %cst_129 = arith.constant 1.900000e+01 : f32
      %554 = vector.broadcast %cst_129 : f32 to vector<8x128xf32>
      %555 = arith.cmpf olt, %547, %554 : vector<8x128xf32>
      %556 = arith.extui %555 : vector<8x128xi1> to vector<8x128xi32>
      %557 = arith.sitofp %556 : vector<8x128xi32> to vector<8x128xf32>
      %558 = arith.mulf %545, %1 : vector<8x128xf32>
      %559 = arith.mulf %546, %7 : vector<8x128xf32>
      %560 = arith.addf %558, %559 : vector<8x128xf32>
      %561 = arith.addf %560, %13 : vector<8x128xf32>
      %562 = arith.mulf %545, %3 : vector<8x128xf32>
      %563 = arith.mulf %546, %9 : vector<8x128xf32>
      %564 = arith.addf %562, %563 : vector<8x128xf32>
      %565 = arith.addf %564, %15 : vector<8x128xf32>
      %566 = arith.mulf %545, %5 : vector<8x128xf32>
      %567 = arith.mulf %546, %11 : vector<8x128xf32>
      %568 = arith.addf %566, %567 : vector<8x128xf32>
      %569 = arith.addf %568, %17 : vector<8x128xf32>
      %570 = arith.subf %565, %561 : vector<8x128xf32>
      %571 = arith.subf %569, %561 : vector<8x128xf32>
      %572 = arith.subf %569, %565 : vector<8x128xf32>
      %cst_130 = arith.constant 0.000000e+00 : f32
      %573 = vector.broadcast %cst_130 : f32 to vector<8x128xf32>
      %574 = arith.cmpf ole, %571, %573 : vector<8x128xf32>
      %cst_131 = arith.constant -1.000000e+00 : f32
      %cst_132 = arith.constant 1.000000e+00 : f32
      %575 = vector.broadcast %cst_131 : f32 to vector<8x128xf32>
      %576 = vector.broadcast %cst_132 : f32 to vector<8x128xf32>
      %577 = arith.select %574, %575, %576 : vector<8x128xi1>, vector<8x128xf32>
      %cst_133 = arith.constant 0.000000e+00 : f32
      %578 = vector.broadcast %cst_133 : f32 to vector<8x128xf32>
      %579 = arith.cmpf ole, %572, %578 : vector<8x128xf32>
      %cst_134 = arith.constant 0.000000e+00 : f32
      %cst_135 = arith.constant 1.000000e+00 : f32
      %580 = vector.broadcast %cst_134 : f32 to vector<8x128xf32>
      %581 = vector.broadcast %cst_135 : f32 to vector<8x128xf32>
      %582 = arith.select %579, %580, %581 : vector<8x128xi1>, vector<8x128xf32>
      %cst_136 = arith.constant 0.000000e+00 : f32
      %583 = vector.broadcast %cst_136 : f32 to vector<8x128xf32>
      %584 = arith.cmpf ole, %570, %583 : vector<8x128xf32>
      %585 = arith.select %584, %577, %582 : vector<8x128xi1>, vector<8x128xf32>
      %586 = arith.mulf %585, %557 : vector<8x128xf32>
      %587 = arith.addf %545, %586 : vector<8x128xf32>
      %588 = arith.addf %546, %557 : vector<8x128xf32>
      %589 = arith.addf %547, %557 : vector<8x128xf32>
      %590 = arith.select %555, %561, %548 : vector<8x128xi1>, vector<8x128xf32>
      %591 = arith.select %555, %565, %549 : vector<8x128xi1>, vector<8x128xf32>
      %592 = arith.select %555, %569, %550 : vector<8x128xi1>, vector<8x128xf32>
      %593 = arith.select %555, %570, %551 : vector<8x128xi1>, vector<8x128xf32>
      %594 = arith.select %555, %571, %552 : vector<8x128xi1>, vector<8x128xf32>
      %595 = arith.select %555, %572, %553 : vector<8x128xi1>, vector<8x128xf32>
      %c13_i32 = arith.constant 13 : i32
      %cst_137 = arith.constant 1.900000e+01 : f32
      %596 = vector.broadcast %cst_137 : f32 to vector<8x128xf32>
      %597 = arith.cmpf olt, %589, %596 : vector<8x128xf32>
      %598 = arith.extui %597 : vector<8x128xi1> to vector<8x128xi32>
      %599 = arith.sitofp %598 : vector<8x128xi32> to vector<8x128xf32>
      %600 = arith.mulf %587, %1 : vector<8x128xf32>
      %601 = arith.mulf %588, %7 : vector<8x128xf32>
      %602 = arith.addf %600, %601 : vector<8x128xf32>
      %603 = arith.addf %602, %13 : vector<8x128xf32>
      %604 = arith.mulf %587, %3 : vector<8x128xf32>
      %605 = arith.mulf %588, %9 : vector<8x128xf32>
      %606 = arith.addf %604, %605 : vector<8x128xf32>
      %607 = arith.addf %606, %15 : vector<8x128xf32>
      %608 = arith.mulf %587, %5 : vector<8x128xf32>
      %609 = arith.mulf %588, %11 : vector<8x128xf32>
      %610 = arith.addf %608, %609 : vector<8x128xf32>
      %611 = arith.addf %610, %17 : vector<8x128xf32>
      %612 = arith.subf %607, %603 : vector<8x128xf32>
      %613 = arith.subf %611, %603 : vector<8x128xf32>
      %614 = arith.subf %611, %607 : vector<8x128xf32>
      %cst_138 = arith.constant 0.000000e+00 : f32
      %615 = vector.broadcast %cst_138 : f32 to vector<8x128xf32>
      %616 = arith.cmpf ole, %613, %615 : vector<8x128xf32>
      %cst_139 = arith.constant -1.000000e+00 : f32
      %cst_140 = arith.constant 1.000000e+00 : f32
      %617 = vector.broadcast %cst_139 : f32 to vector<8x128xf32>
      %618 = vector.broadcast %cst_140 : f32 to vector<8x128xf32>
      %619 = arith.select %616, %617, %618 : vector<8x128xi1>, vector<8x128xf32>
      %cst_141 = arith.constant 0.000000e+00 : f32
      %620 = vector.broadcast %cst_141 : f32 to vector<8x128xf32>
      %621 = arith.cmpf ole, %614, %620 : vector<8x128xf32>
      %cst_142 = arith.constant 0.000000e+00 : f32
      %cst_143 = arith.constant 1.000000e+00 : f32
      %622 = vector.broadcast %cst_142 : f32 to vector<8x128xf32>
      %623 = vector.broadcast %cst_143 : f32 to vector<8x128xf32>
      %624 = arith.select %621, %622, %623 : vector<8x128xi1>, vector<8x128xf32>
      %cst_144 = arith.constant 0.000000e+00 : f32
      %625 = vector.broadcast %cst_144 : f32 to vector<8x128xf32>
      %626 = arith.cmpf ole, %612, %625 : vector<8x128xf32>
      %627 = arith.select %626, %619, %624 : vector<8x128xi1>, vector<8x128xf32>
      %628 = arith.mulf %627, %599 : vector<8x128xf32>
      %629 = arith.addf %587, %628 : vector<8x128xf32>
      %630 = arith.addf %588, %599 : vector<8x128xf32>
      %631 = arith.addf %589, %599 : vector<8x128xf32>
      %632 = arith.select %597, %603, %590 : vector<8x128xi1>, vector<8x128xf32>
      %633 = arith.select %597, %607, %591 : vector<8x128xi1>, vector<8x128xf32>
      %634 = arith.select %597, %611, %592 : vector<8x128xi1>, vector<8x128xf32>
      %635 = arith.select %597, %612, %593 : vector<8x128xi1>, vector<8x128xf32>
      %636 = arith.select %597, %613, %594 : vector<8x128xi1>, vector<8x128xf32>
      %637 = arith.select %597, %614, %595 : vector<8x128xi1>, vector<8x128xf32>
      %c14_i32 = arith.constant 14 : i32
      %cst_145 = arith.constant 1.900000e+01 : f32
      %638 = vector.broadcast %cst_145 : f32 to vector<8x128xf32>
      %639 = arith.cmpf olt, %631, %638 : vector<8x128xf32>
      %640 = arith.extui %639 : vector<8x128xi1> to vector<8x128xi32>
      %641 = arith.sitofp %640 : vector<8x128xi32> to vector<8x128xf32>
      %642 = arith.mulf %629, %1 : vector<8x128xf32>
      %643 = arith.mulf %630, %7 : vector<8x128xf32>
      %644 = arith.addf %642, %643 : vector<8x128xf32>
      %645 = arith.addf %644, %13 : vector<8x128xf32>
      %646 = arith.mulf %629, %3 : vector<8x128xf32>
      %647 = arith.mulf %630, %9 : vector<8x128xf32>
      %648 = arith.addf %646, %647 : vector<8x128xf32>
      %649 = arith.addf %648, %15 : vector<8x128xf32>
      %650 = arith.mulf %629, %5 : vector<8x128xf32>
      %651 = arith.mulf %630, %11 : vector<8x128xf32>
      %652 = arith.addf %650, %651 : vector<8x128xf32>
      %653 = arith.addf %652, %17 : vector<8x128xf32>
      %654 = arith.subf %649, %645 : vector<8x128xf32>
      %655 = arith.subf %653, %645 : vector<8x128xf32>
      %656 = arith.subf %653, %649 : vector<8x128xf32>
      %cst_146 = arith.constant 0.000000e+00 : f32
      %657 = vector.broadcast %cst_146 : f32 to vector<8x128xf32>
      %658 = arith.cmpf ole, %655, %657 : vector<8x128xf32>
      %cst_147 = arith.constant -1.000000e+00 : f32
      %cst_148 = arith.constant 1.000000e+00 : f32
      %659 = vector.broadcast %cst_147 : f32 to vector<8x128xf32>
      %660 = vector.broadcast %cst_148 : f32 to vector<8x128xf32>
      %661 = arith.select %658, %659, %660 : vector<8x128xi1>, vector<8x128xf32>
      %cst_149 = arith.constant 0.000000e+00 : f32
      %662 = vector.broadcast %cst_149 : f32 to vector<8x128xf32>
      %663 = arith.cmpf ole, %656, %662 : vector<8x128xf32>
      %cst_150 = arith.constant 0.000000e+00 : f32
      %cst_151 = arith.constant 1.000000e+00 : f32
      %664 = vector.broadcast %cst_150 : f32 to vector<8x128xf32>
      %665 = vector.broadcast %cst_151 : f32 to vector<8x128xf32>
      %666 = arith.select %663, %664, %665 : vector<8x128xi1>, vector<8x128xf32>
      %cst_152 = arith.constant 0.000000e+00 : f32
      %667 = vector.broadcast %cst_152 : f32 to vector<8x128xf32>
      %668 = arith.cmpf ole, %654, %667 : vector<8x128xf32>
      %669 = arith.select %668, %661, %666 : vector<8x128xi1>, vector<8x128xf32>
      %670 = arith.mulf %669, %641 : vector<8x128xf32>
      %671 = arith.addf %629, %670 : vector<8x128xf32>
      %672 = arith.addf %630, %641 : vector<8x128xf32>
      %673 = arith.addf %631, %641 : vector<8x128xf32>
      %674 = arith.select %639, %645, %632 : vector<8x128xi1>, vector<8x128xf32>
      %675 = arith.select %639, %649, %633 : vector<8x128xi1>, vector<8x128xf32>
      %676 = arith.select %639, %653, %634 : vector<8x128xi1>, vector<8x128xf32>
      %677 = arith.select %639, %654, %635 : vector<8x128xi1>, vector<8x128xf32>
      %678 = arith.select %639, %655, %636 : vector<8x128xi1>, vector<8x128xf32>
      %679 = arith.select %639, %656, %637 : vector<8x128xi1>, vector<8x128xf32>
      %c15_i32 = arith.constant 15 : i32
      %cst_153 = arith.constant 1.900000e+01 : f32
      %680 = vector.broadcast %cst_153 : f32 to vector<8x128xf32>
      %681 = arith.cmpf olt, %673, %680 : vector<8x128xf32>
      %682 = arith.extui %681 : vector<8x128xi1> to vector<8x128xi32>
      %683 = arith.sitofp %682 : vector<8x128xi32> to vector<8x128xf32>
      %684 = arith.mulf %671, %1 : vector<8x128xf32>
      %685 = arith.mulf %672, %7 : vector<8x128xf32>
      %686 = arith.addf %684, %685 : vector<8x128xf32>
      %687 = arith.addf %686, %13 : vector<8x128xf32>
      %688 = arith.mulf %671, %3 : vector<8x128xf32>
      %689 = arith.mulf %672, %9 : vector<8x128xf32>
      %690 = arith.addf %688, %689 : vector<8x128xf32>
      %691 = arith.addf %690, %15 : vector<8x128xf32>
      %692 = arith.mulf %671, %5 : vector<8x128xf32>
      %693 = arith.mulf %672, %11 : vector<8x128xf32>
      %694 = arith.addf %692, %693 : vector<8x128xf32>
      %695 = arith.addf %694, %17 : vector<8x128xf32>
      %696 = arith.subf %691, %687 : vector<8x128xf32>
      %697 = arith.subf %695, %687 : vector<8x128xf32>
      %698 = arith.subf %695, %691 : vector<8x128xf32>
      %cst_154 = arith.constant 0.000000e+00 : f32
      %699 = vector.broadcast %cst_154 : f32 to vector<8x128xf32>
      %700 = arith.cmpf ole, %697, %699 : vector<8x128xf32>
      %cst_155 = arith.constant -1.000000e+00 : f32
      %cst_156 = arith.constant 1.000000e+00 : f32
      %701 = vector.broadcast %cst_155 : f32 to vector<8x128xf32>
      %702 = vector.broadcast %cst_156 : f32 to vector<8x128xf32>
      %703 = arith.select %700, %701, %702 : vector<8x128xi1>, vector<8x128xf32>
      %cst_157 = arith.constant 0.000000e+00 : f32
      %704 = vector.broadcast %cst_157 : f32 to vector<8x128xf32>
      %705 = arith.cmpf ole, %698, %704 : vector<8x128xf32>
      %cst_158 = arith.constant 0.000000e+00 : f32
      %cst_159 = arith.constant 1.000000e+00 : f32
      %706 = vector.broadcast %cst_158 : f32 to vector<8x128xf32>
      %707 = vector.broadcast %cst_159 : f32 to vector<8x128xf32>
      %708 = arith.select %705, %706, %707 : vector<8x128xi1>, vector<8x128xf32>
      %cst_160 = arith.constant 0.000000e+00 : f32
      %709 = vector.broadcast %cst_160 : f32 to vector<8x128xf32>
      %710 = arith.cmpf ole, %696, %709 : vector<8x128xf32>
      %711 = arith.select %710, %703, %708 : vector<8x128xi1>, vector<8x128xf32>
      %712 = arith.mulf %711, %683 : vector<8x128xf32>
      %713 = arith.addf %671, %712 : vector<8x128xf32>
      %714 = arith.addf %672, %683 : vector<8x128xf32>
      %715 = arith.addf %673, %683 : vector<8x128xf32>
      %716 = arith.select %681, %687, %674 : vector<8x128xi1>, vector<8x128xf32>
      %717 = arith.select %681, %691, %675 : vector<8x128xi1>, vector<8x128xf32>
      %718 = arith.select %681, %695, %676 : vector<8x128xi1>, vector<8x128xf32>
      %719 = arith.select %681, %696, %677 : vector<8x128xi1>, vector<8x128xf32>
      %720 = arith.select %681, %697, %678 : vector<8x128xi1>, vector<8x128xf32>
      %721 = arith.select %681, %698, %679 : vector<8x128xi1>, vector<8x128xf32>
      %c16_i32 = arith.constant 16 : i32
      %cst_161 = arith.constant 1.900000e+01 : f32
      %722 = vector.broadcast %cst_161 : f32 to vector<8x128xf32>
      %723 = arith.cmpf olt, %715, %722 : vector<8x128xf32>
      %724 = arith.extui %723 : vector<8x128xi1> to vector<8x128xi32>
      %725 = arith.sitofp %724 : vector<8x128xi32> to vector<8x128xf32>
      %726 = arith.mulf %713, %1 : vector<8x128xf32>
      %727 = arith.mulf %714, %7 : vector<8x128xf32>
      %728 = arith.addf %726, %727 : vector<8x128xf32>
      %729 = arith.addf %728, %13 : vector<8x128xf32>
      %730 = arith.mulf %713, %3 : vector<8x128xf32>
      %731 = arith.mulf %714, %9 : vector<8x128xf32>
      %732 = arith.addf %730, %731 : vector<8x128xf32>
      %733 = arith.addf %732, %15 : vector<8x128xf32>
      %734 = arith.mulf %713, %5 : vector<8x128xf32>
      %735 = arith.mulf %714, %11 : vector<8x128xf32>
      %736 = arith.addf %734, %735 : vector<8x128xf32>
      %737 = arith.addf %736, %17 : vector<8x128xf32>
      %738 = arith.subf %733, %729 : vector<8x128xf32>
      %739 = arith.subf %737, %729 : vector<8x128xf32>
      %740 = arith.subf %737, %733 : vector<8x128xf32>
      %cst_162 = arith.constant 0.000000e+00 : f32
      %741 = vector.broadcast %cst_162 : f32 to vector<8x128xf32>
      %742 = arith.cmpf ole, %739, %741 : vector<8x128xf32>
      %cst_163 = arith.constant -1.000000e+00 : f32
      %cst_164 = arith.constant 1.000000e+00 : f32
      %743 = vector.broadcast %cst_163 : f32 to vector<8x128xf32>
      %744 = vector.broadcast %cst_164 : f32 to vector<8x128xf32>
      %745 = arith.select %742, %743, %744 : vector<8x128xi1>, vector<8x128xf32>
      %cst_165 = arith.constant 0.000000e+00 : f32
      %746 = vector.broadcast %cst_165 : f32 to vector<8x128xf32>
      %747 = arith.cmpf ole, %740, %746 : vector<8x128xf32>
      %cst_166 = arith.constant 0.000000e+00 : f32
      %cst_167 = arith.constant 1.000000e+00 : f32
      %748 = vector.broadcast %cst_166 : f32 to vector<8x128xf32>
      %749 = vector.broadcast %cst_167 : f32 to vector<8x128xf32>
      %750 = arith.select %747, %748, %749 : vector<8x128xi1>, vector<8x128xf32>
      %cst_168 = arith.constant 0.000000e+00 : f32
      %751 = vector.broadcast %cst_168 : f32 to vector<8x128xf32>
      %752 = arith.cmpf ole, %738, %751 : vector<8x128xf32>
      %753 = arith.select %752, %745, %750 : vector<8x128xi1>, vector<8x128xf32>
      %754 = arith.mulf %753, %725 : vector<8x128xf32>
      %755 = arith.addf %713, %754 : vector<8x128xf32>
      %756 = arith.addf %714, %725 : vector<8x128xf32>
      %757 = arith.addf %715, %725 : vector<8x128xf32>
      %758 = arith.select %723, %729, %716 : vector<8x128xi1>, vector<8x128xf32>
      %759 = arith.select %723, %733, %717 : vector<8x128xi1>, vector<8x128xf32>
      %760 = arith.select %723, %737, %718 : vector<8x128xi1>, vector<8x128xf32>
      %761 = arith.select %723, %738, %719 : vector<8x128xi1>, vector<8x128xf32>
      %762 = arith.select %723, %739, %720 : vector<8x128xi1>, vector<8x128xf32>
      %763 = arith.select %723, %740, %721 : vector<8x128xi1>, vector<8x128xf32>
      %c17_i32 = arith.constant 17 : i32
      %cst_169 = arith.constant 1.900000e+01 : f32
      %764 = vector.broadcast %cst_169 : f32 to vector<8x128xf32>
      %765 = arith.cmpf olt, %757, %764 : vector<8x128xf32>
      %766 = arith.extui %765 : vector<8x128xi1> to vector<8x128xi32>
      %767 = arith.sitofp %766 : vector<8x128xi32> to vector<8x128xf32>
      %768 = arith.mulf %755, %1 : vector<8x128xf32>
      %769 = arith.mulf %756, %7 : vector<8x128xf32>
      %770 = arith.addf %768, %769 : vector<8x128xf32>
      %771 = arith.addf %770, %13 : vector<8x128xf32>
      %772 = arith.mulf %755, %3 : vector<8x128xf32>
      %773 = arith.mulf %756, %9 : vector<8x128xf32>
      %774 = arith.addf %772, %773 : vector<8x128xf32>
      %775 = arith.addf %774, %15 : vector<8x128xf32>
      %776 = arith.mulf %755, %5 : vector<8x128xf32>
      %777 = arith.mulf %756, %11 : vector<8x128xf32>
      %778 = arith.addf %776, %777 : vector<8x128xf32>
      %779 = arith.addf %778, %17 : vector<8x128xf32>
      %780 = arith.subf %775, %771 : vector<8x128xf32>
      %781 = arith.subf %779, %771 : vector<8x128xf32>
      %782 = arith.subf %779, %775 : vector<8x128xf32>
      %cst_170 = arith.constant 0.000000e+00 : f32
      %783 = vector.broadcast %cst_170 : f32 to vector<8x128xf32>
      %784 = arith.cmpf ole, %781, %783 : vector<8x128xf32>
      %cst_171 = arith.constant -1.000000e+00 : f32
      %cst_172 = arith.constant 1.000000e+00 : f32
      %785 = vector.broadcast %cst_171 : f32 to vector<8x128xf32>
      %786 = vector.broadcast %cst_172 : f32 to vector<8x128xf32>
      %787 = arith.select %784, %785, %786 : vector<8x128xi1>, vector<8x128xf32>
      %cst_173 = arith.constant 0.000000e+00 : f32
      %788 = vector.broadcast %cst_173 : f32 to vector<8x128xf32>
      %789 = arith.cmpf ole, %782, %788 : vector<8x128xf32>
      %cst_174 = arith.constant 0.000000e+00 : f32
      %cst_175 = arith.constant 1.000000e+00 : f32
      %790 = vector.broadcast %cst_174 : f32 to vector<8x128xf32>
      %791 = vector.broadcast %cst_175 : f32 to vector<8x128xf32>
      %792 = arith.select %789, %790, %791 : vector<8x128xi1>, vector<8x128xf32>
      %cst_176 = arith.constant 0.000000e+00 : f32
      %793 = vector.broadcast %cst_176 : f32 to vector<8x128xf32>
      %794 = arith.cmpf ole, %780, %793 : vector<8x128xf32>
      %795 = arith.select %794, %787, %792 : vector<8x128xi1>, vector<8x128xf32>
      %796 = arith.mulf %795, %767 : vector<8x128xf32>
      %797 = arith.addf %755, %796 : vector<8x128xf32>
      %798 = arith.addf %756, %767 : vector<8x128xf32>
      %799 = arith.addf %757, %767 : vector<8x128xf32>
      %800 = arith.select %765, %771, %758 : vector<8x128xi1>, vector<8x128xf32>
      %801 = arith.select %765, %775, %759 : vector<8x128xi1>, vector<8x128xf32>
      %802 = arith.select %765, %779, %760 : vector<8x128xi1>, vector<8x128xf32>
      %803 = arith.select %765, %780, %761 : vector<8x128xi1>, vector<8x128xf32>
      %804 = arith.select %765, %781, %762 : vector<8x128xi1>, vector<8x128xf32>
      %805 = arith.select %765, %782, %763 : vector<8x128xi1>, vector<8x128xf32>
      %c18_i32 = arith.constant 18 : i32
      %cst_177 = arith.constant 1.900000e+01 : f32
      %806 = vector.broadcast %cst_177 : f32 to vector<8x128xf32>
      %807 = arith.cmpf olt, %799, %806 : vector<8x128xf32>
      %808 = arith.extui %807 : vector<8x128xi1> to vector<8x128xi32>
      %809 = arith.sitofp %808 : vector<8x128xi32> to vector<8x128xf32>
      %810 = arith.mulf %797, %1 : vector<8x128xf32>
      %811 = arith.mulf %798, %7 : vector<8x128xf32>
      %812 = arith.addf %810, %811 : vector<8x128xf32>
      %813 = arith.addf %812, %13 : vector<8x128xf32>
      %814 = arith.mulf %797, %3 : vector<8x128xf32>
      %815 = arith.mulf %798, %9 : vector<8x128xf32>
      %816 = arith.addf %814, %815 : vector<8x128xf32>
      %817 = arith.addf %816, %15 : vector<8x128xf32>
      %818 = arith.mulf %797, %5 : vector<8x128xf32>
      %819 = arith.mulf %798, %11 : vector<8x128xf32>
      %820 = arith.addf %818, %819 : vector<8x128xf32>
      %821 = arith.addf %820, %17 : vector<8x128xf32>
      %822 = arith.subf %817, %813 : vector<8x128xf32>
      %823 = arith.subf %821, %813 : vector<8x128xf32>
      %824 = arith.subf %821, %817 : vector<8x128xf32>
      %cst_178 = arith.constant 0.000000e+00 : f32
      %825 = vector.broadcast %cst_178 : f32 to vector<8x128xf32>
      %826 = arith.cmpf ole, %823, %825 : vector<8x128xf32>
      %cst_179 = arith.constant -1.000000e+00 : f32
      %cst_180 = arith.constant 1.000000e+00 : f32
      %827 = vector.broadcast %cst_179 : f32 to vector<8x128xf32>
      %828 = vector.broadcast %cst_180 : f32 to vector<8x128xf32>
      %829 = arith.select %826, %827, %828 : vector<8x128xi1>, vector<8x128xf32>
      %cst_181 = arith.constant 0.000000e+00 : f32
      %830 = vector.broadcast %cst_181 : f32 to vector<8x128xf32>
      %831 = arith.cmpf ole, %824, %830 : vector<8x128xf32>
      %cst_182 = arith.constant 0.000000e+00 : f32
      %cst_183 = arith.constant 1.000000e+00 : f32
      %832 = vector.broadcast %cst_182 : f32 to vector<8x128xf32>
      %833 = vector.broadcast %cst_183 : f32 to vector<8x128xf32>
      %834 = arith.select %831, %832, %833 : vector<8x128xi1>, vector<8x128xf32>
      %cst_184 = arith.constant 0.000000e+00 : f32
      %835 = vector.broadcast %cst_184 : f32 to vector<8x128xf32>
      %836 = arith.cmpf ole, %822, %835 : vector<8x128xf32>
      %837 = arith.select %836, %829, %834 : vector<8x128xi1>, vector<8x128xf32>
      %838 = arith.mulf %837, %809 : vector<8x128xf32>
      %839 = arith.addf %797, %838 : vector<8x128xf32>
      %840 = arith.addf %798, %809 : vector<8x128xf32>
      %841 = arith.addf %799, %809 : vector<8x128xf32>
      %842 = arith.select %807, %813, %800 : vector<8x128xi1>, vector<8x128xf32>
      %843 = arith.select %807, %817, %801 : vector<8x128xi1>, vector<8x128xf32>
      %844 = arith.select %807, %821, %802 : vector<8x128xi1>, vector<8x128xf32>
      %845 = arith.select %807, %822, %803 : vector<8x128xi1>, vector<8x128xf32>
      %846 = arith.select %807, %823, %804 : vector<8x128xi1>, vector<8x128xf32>
      %847 = arith.select %807, %824, %805 : vector<8x128xi1>, vector<8x128xf32>
      %c0_185 = arith.constant 0 : index
      %848 = arith.index_cast %22 : i32 to index
      %c0_186 = arith.constant 0 : index
      %849 = vector.load %arg4[%c0_185, %848, %c0_186] : memref<9x16x128xf32, #tpu.memory_space<vmem>>, vector<1x8x128xf32>
      %850 = vector.shape_cast %849 : vector<1x8x128xf32> to vector<8x128xf32>
      %851 = vector.shape_cast %839 : vector<8x128xf32> to vector<1x8x128xf32>
      tpu.vector_store %arg4[%c0_185, %848, %c0_186], %851 {strides = array<i32>} : memref<9x16x128xf32, #tpu.memory_space<vmem>>, vector<1x8x128xf32>,
      %c1_187 = arith.constant 1 : index
      %852 = arith.index_cast %22 : i32 to index
      %c0_188 = arith.constant 0 : index
      %853 = vector.load %arg4[%c1_187, %852, %c0_188] : memref<9x16x128xf32, #tpu.memory_space<vmem>>, vector<1x8x128xf32>
      %854 = vector.shape_cast %853 : vector<1x8x128xf32> to vector<8x128xf32>
      %855 = vector.shape_cast %840 : vector<8x128xf32> to vector<1x8x128xf32>
      tpu.vector_store %arg4[%c1_187, %852, %c0_188], %855 {strides = array<i32>} : memref<9x16x128xf32, #tpu.memory_space<vmem>>, vector<1x8x128xf32>,
      %c2_189 = arith.constant 2 : index
      %856 = arith.index_cast %22 : i32 to index
      %c0_190 = arith.constant 0 : index
      %857 = vector.load %arg4[%c2_189, %856, %c0_190] : memref<9x16x128xf32, #tpu.memory_space<vmem>>, vector<1x8x128xf32>
      %858 = vector.shape_cast %857 : vector<1x8x128xf32> to vector<8x128xf32>
      %859 = vector.shape_cast %842 : vector<8x128xf32> to vector<1x8x128xf32>
      tpu.vector_store %arg4[%c2_189, %856, %c0_190], %859 {strides = array<i32>} : memref<9x16x128xf32, #tpu.memory_space<vmem>>, vector<1x8x128xf32>,
      %c3_191 = arith.constant 3 : index
      %860 = arith.index_cast %22 : i32 to index
      %c0_192 = arith.constant 0 : index
      %861 = vector.load %arg4[%c3_191, %860, %c0_192] : memref<9x16x128xf32, #tpu.memory_space<vmem>>, vector<1x8x128xf32>
      %862 = vector.shape_cast %861 : vector<1x8x128xf32> to vector<8x128xf32>
      %863 = vector.shape_cast %843 : vector<8x128xf32> to vector<1x8x128xf32>
      tpu.vector_store %arg4[%c3_191, %860, %c0_192], %863 {strides = array<i32>} : memref<9x16x128xf32, #tpu.memory_space<vmem>>, vector<1x8x128xf32>,
      %c4_193 = arith.constant 4 : index
      %864 = arith.index_cast %22 : i32 to index
      %c0_194 = arith.constant 0 : index
      %865 = vector.load %arg4[%c4_193, %864, %c0_194] : memref<9x16x128xf32, #tpu.memory_space<vmem>>, vector<1x8x128xf32>
      %866 = vector.shape_cast %865 : vector<1x8x128xf32> to vector<8x128xf32>
      %867 = vector.shape_cast %844 : vector<8x128xf32> to vector<1x8x128xf32>
      tpu.vector_store %arg4[%c4_193, %864, %c0_194], %867 {strides = array<i32>} : memref<9x16x128xf32, #tpu.memory_space<vmem>>, vector<1x8x128xf32>,
      %c5_195 = arith.constant 5 : index
      %868 = arith.index_cast %22 : i32 to index
      %c0_196 = arith.constant 0 : index
      %869 = vector.load %arg4[%c5_195, %868, %c0_196] : memref<9x16x128xf32, #tpu.memory_space<vmem>>, vector<1x8x128xf32>
      %870 = vector.shape_cast %869 : vector<1x8x128xf32> to vector<8x128xf32>
      %871 = vector.shape_cast %841 : vector<8x128xf32> to vector<1x8x128xf32>
      tpu.vector_store %arg4[%c5_195, %868, %c0_196], %871 {strides = array<i32>} : memref<9x16x128xf32, #tpu.memory_space<vmem>>, vector<1x8x128xf32>,
      %c6_197 = arith.constant 6 : index
      %872 = arith.index_cast %22 : i32 to index
      %c0_198 = arith.constant 0 : index
      %873 = vector.load %arg4[%c6_197, %872, %c0_198] : memref<9x16x128xf32, #tpu.memory_space<vmem>>, vector<1x8x128xf32>
      %874 = vector.shape_cast %873 : vector<1x8x128xf32> to vector<8x128xf32>
      %875 = vector.shape_cast %845 : vector<8x128xf32> to vector<1x8x128xf32>
      tpu.vector_store %arg4[%c6_197, %872, %c0_198], %875 {strides = array<i32>} : memref<9x16x128xf32, #tpu.memory_space<vmem>>, vector<1x8x128xf32>,
      %c7_199 = arith.constant 7 : index
      %876 = arith.index_cast %22 : i32 to index
      %c0_200 = arith.constant 0 : index
      %877 = vector.load %arg4[%c7_199, %876, %c0_200] : memref<9x16x128xf32, #tpu.memory_space<vmem>>, vector<1x8x128xf32>
      %878 = vector.shape_cast %877 : vector<1x8x128xf32> to vector<8x128xf32>
      %879 = vector.shape_cast %846 : vector<8x128xf32> to vector<1x8x128xf32>
      tpu.vector_store %arg4[%c7_199, %876, %c0_200], %879 {strides = array<i32>} : memref<9x16x128xf32, #tpu.memory_space<vmem>>, vector<1x8x128xf32>,
      %c8_201 = arith.constant 8 : index
      %880 = arith.index_cast %22 : i32 to index
      %c0_202 = arith.constant 0 : index
      %881 = vector.load %arg4[%c8_201, %880, %c0_202] : memref<9x16x128xf32, #tpu.memory_space<vmem>>, vector<1x8x128xf32>
      %882 = vector.shape_cast %881 : vector<1x8x128xf32> to vector<8x128xf32>
      %883 = vector.shape_cast %847 : vector<8x128xf32> to vector<1x8x128xf32>
      tpu.vector_store %arg4[%c8_201, %880, %c0_202], %883 {strides = array<i32>} : memref<9x16x128xf32, #tpu.memory_space<vmem>>, vector<1x8x128xf32>,
    }
    %c2_i32_15 = arith.constant 2 : i32
    return
  }
  func.func @transform_0(%arg0: i32) -> (i32, i32) {
    %c0_i32 = arith.constant 0 : i32
    %c0_i32_0 = arith.constant 0 : i32
    %c0_i32_1 = arith.constant 0 : i32
    return %c0_i32, %c0_i32_0 : i32, i32
  }
  func.func @transform_1(%arg0: i32) -> (i32, i32) {
    %c0_i32 = arith.constant 0 : i32
    %c0_i32_0 = arith.constant 0 : i32
    %c0_i32_1 = arith.constant 0 : i32
    return %c0_i32, %c0_i32_0 : i32, i32
  }
  func.func @transform_2(%arg0: i32) -> (i32, i32, i32) {
    %c0_i32 = arith.constant 0 : i32
    %c0_i32_0 = arith.constant 0 : i32
    %c0_i32_1 = arith.constant 0 : i32
    return %c0_i32, %arg0, %c0_i32_0 : i32, i32, i32
  }
  func.func @transform_3(%arg0: i32) -> (i32, i32, i32) {
    %c0_i32 = arith.constant 0 : i32
    %c0_i32_0 = arith.constant 0 : i32
    %c0_i32_1 = arith.constant 0 : i32
    return %c0_i32, %arg0, %c0_i32_0 : i32, i32, i32
  }
}

</mosaic_0001>

<llo_original>
// kernel: tpu_custom_call.1
$region0: #{tpu_custom_call.1}
  #allocation0 [shape = 'u32[]', space=smem, size = 0x4, offset = 0x4, fixed_abs, tag = 'smem constant byte address 0x4 - core index']
  #allocation1 [shape = 'u32[144,128]{1,0:T(1,128)}', space=vmem, size = 0x12000, scoped, tag = 'internal scratch']
  #allocation10 [shape = 's32[]', space=sflag, size = 0x4, offset = 0, fixed_abs, tag = 'sflag constant byte address 0x0 - dummy sync flag']
  #allocation12 [shape = 's32[]', space=sflag, size = 0x4, offset = 0, fixed_abs, tag = 'sflag constant byte address 0x0 - dummy sync flag']
  %s0 = inlined_call_operand.hbm [shape: f32[2,3], index: 0, kind: input, shape index: {}]
  %s1 = inlined_call_operand.vmem [shape: f32[1,3], index: 1, kind: input, shape index: {}]
  %s2 = inlined_call_operand.hbm [shape: f32[9,32,128], index: 2, kind: input, shape index: {}]
  %s3 = inlined_call_operand.hbm [shape: f32[9,32,128], index: 3, kind: output, shape index: {}]
  %s4 = sld [smem:[#allocation0]]
  $region64: #{tpu_custom_call.1} parent=0
    _
  %s6 = ssub.s32 1, %s4
  %s7 = scalar_select 0, %s6, %s4
  $region1: #{tpu_custom_call.1} parent=0
    #allocation2 [shape = 'u8[1024]{0}', space=smem, size = 0x400, scoped, tag = 'input window, operand 0, single buffered']
    #allocation3 [shape = 's32[2]{0}', space=sflag, size = 0x8, scoped, tag = 'scoped memory for tpu_custom_call.1']
    #allocation4 [shape = 's32[2]{0}', space=sflag, size = 0x8, scoped, tag = 'scoped memory for tpu_custom_call.1']
    #allocation5 [shape = 's32[2]{0}', space=sflag, size = 0x8, scoped, tag = 'scoped memory for tpu_custom_call.1']
    #allocation6 [shape = 's32[2]{0}', space=sflag, size = 0x8, scoped, tag = 'scoped memory for tpu_custom_call.1']
    #allocation7 [shape = 'u8[512]{0}', space=smem, size = 0x200, scoped, tag = 'input window, operand 1, single buffered']
    #allocation8 [shape = 'u8[147456]{0}', space=vmem, size = 0x24000, scoped, tag = 'input window, operand 2']
    #allocation9 [shape = 'u8[147456]{0}', space=vmem, size = 0x24000, scoped, tag = 'output window, operand 0']
    %8 = vsyncpa [#allocation5], 0
    %9 = vsyncpa [#allocation6], 0
    %10 = vsyncpa [#allocation3], 0
    %s11 = scalar_lea.sflag [#allocation3], 1
    %12 = vsyncpa %s11, 0
    %13 = vsyncpa [#allocation4], 0
    %s14 = scalar_lea.sflag [#allocation4], 1
    %15 = vsyncpa %s14, 0
    loop: start=0, step=1, limit=4
    $region2: #{tpu_custom_call.1} parent=1 // loop_pre_header
      _
    $region3: #{tpu_custom_call.1} parent=1 // loop_header
      %s17 = sphi 0, %s21
      %p18 = scmp.ge.s32.totalorder %s17, 4
      %s25 = sphi 0, %s25
      %s27 = sphi 0, %s25
      %s28 = sphi 0, %s27
      %s42 = sphi 0, %s28
      %s46 = sphi 0, %s46
      %s48 = sphi 0, %s46
      %s49 = sphi 0, %s48
      %s63 = sphi 0, %s49
      %s69 = sphi 0, %s71
      %s72 = sphi 0, %s69
      %s73 = sphi 0, %s72
      %s89 = sphi 0, %s73
      %s95 = sphi 0, %s97
      %s98 = sphi 0, %s95
      %s99 = sphi 0, %s98
      %s115 = sphi 0, %s99
    $region4: #{tpu_custom_call.1} parent=1 // loop_header_branch
      %20 = sbr.rel (%p18) target = $region8
    $region5: #{tpu_custom_call.1} parent=1 // loop_body
      %s22 = ssub.s32 %s17, 1
      %s23 = ssub.s32 %s17, 2
      %s24 = sadd.s32 %s17, 1
      %s26 = sadd.s32 %s25, 1
      %p29 = scmp.eq.s32.totalorder %s17, 1
      %p30 = scmp.ne.s32.totalorder %s25, %s27
      %p31 = scmp.eq.s32.totalorder %s17, 0
      %p32 = por %p30, %p31
      %p33 = scmp.ne.s32.totalorder %s25, %s27
      %p34 = scmp.eq.s32.totalorder %s22, 1
      %p35 = por %p33, %p34
      %p36 = scmp.ne.s32.totalorder %s27, %s28
      %p37 = scmp.eq.s32.totalorder %s22, 0
      %p38 = por %p36, %p37
      %p39 = scmp.ne.s32.totalorder %s27, %s28
      %p40 = scmp.eq.s32.totalorder %s23, 1
      %p41 = por %p39, %p40
      %p43 = scmp.ne.s32.totalorder %s28, %s42
      %p44 = scmp.eq.s32.totalorder %s23, 0
      %p45 = por %p43, %p44
      %s47 = sadd.s32 %s46, 1
      %p50 = scmp.eq.s32.totalorder %s17, 1
      %p51 = scmp.ne.s32.totalorder %s46, %s48
      %p52 = scmp.eq.s32.totalorder %s17, 0
      %p53 = por %p51, %p52
      %p54 = scmp.ne.s32.totalorder %s46, %s48
      %p55 = scmp.eq.s32.totalorder %s22, 1
      %p56 = por %p54, %p55
      %p57 = scmp.ne.s32.totalorder %s48, %s49
      %p58 = scmp.eq.s32.totalorder %s22, 0
      %p59 = por %p57, %p58
      %p60 = scmp.ne.s32.totalorder %s48, %s49
      %p61 = scmp.eq.s32.totalorder %s23, 1
      %p62 = por %p60, %p61
      %p64 = scmp.ne.s32.totalorder %s49, %s63
      %p65 = scmp.eq.s32.totalorder %s23, 0
      %p66 = por %p64, %p65
      %s67 = ssub.s32 %s17, %s24
      %p68 = scmp.eq.s32.totalorder %s67, 0
      %s70 = sadd.s32 %s69, 1
      %s71 = scalar_select %p68, %s69, %s70
      %p74 = pneg %p68
      %p75 = scmp.eq.s32.totalorder %s17, 1
      %p76 = por %p74, %p75
      %p77 = scmp.ne.s32.totalorder %s69, %s72
      %p78 = scmp.eq.s32.totalorder %s17, 0
      %p79 = por %p77, %p78
      %p80 = scmp.ne.s32.totalorder %s69, %s72
      %p81 = scmp.eq.s32.totalorder %s22, 1
      %p82 = por %p80, %p81
      %p83 = scmp.ne.s32.totalorder %s72, %s73
      %p84 = scmp.eq.s32.totalorder %s22, 0
      %p85 = por %p83, %p84
      %p86 = scmp.ne.s32.totalorder %s72, %s73
      %p87 = scmp.eq.s32.totalorder %s23, 1
      %p88 = por %p86, %p87
      %p90 = scmp.ne.s32.totalorder %s73, %s89
      %p91 = scmp.eq.s32.totalorder %s23, 0
      %p92 = por %p90, %p91
      %s93 = ssub.s32 %s17, %s24
      %p94 = scmp.eq.s32.totalorder %s93, 0
      %s96 = sadd.s32 %s95, 1
      %s97 = scalar_select %p94, %s95, %s96
      %p100 = pneg %p94
      %p101 = scmp.eq.s32.totalorder %s17, 1
      %p102 = por %p100, %p101
      %p103 = scmp.ne.s32.totalorder %s95, %s98
      %p104 = scmp.eq.s32.totalorder %s17, 0
      %p105 = por %p103, %p104
      %p106 = scmp.ne.s32.totalorder %s95, %s98
      %p107 = scmp.eq.s32.totalorder %s22, 1
      %p108 = por %p106, %p107
      %p109 = scmp.ne.s32.totalorder %s98, %s99
      %p110 = scmp.eq.s32.totalorder %s22, 0
      %p111 = por %p109, %p110
      %p112 = scmp.ne.s32.totalorder %s98, %s99
      %p113 = scmp.eq.s32.totalorder %s23, 1
      %p114 = por %p112, %p113
      %p116 = scmp.ne.s32.totalorder %s99, %s115
      %p117 = scmp.eq.s32.totalorder %s23, 0
      %p118 = por %p116, %p117
      %p119 = scmp.le.s32.totalorder 1, %s17
      %p120 = scmp.lt.s32.totalorder %s17, 3
      %p121 = pnand %p119, %p120
      %p122 = pneg %p121
      // Predicated region
      $region9: #{tpu_custom_call.1} parent=5 // pred_check
        _
      $region10: #{tpu_custom_call.1} parent=5 // pred_check_branch
        %124 = sbr.rel (%p121) target = $region12
      $region11: #{tpu_custom_call.1} parent=5 // pred_region
        %s125 = ssub.s32 %s17, 1
        // Predicated region
        $region13: #{tpu_custom_call.1} parent=11 // pred_check
          %p126 = pneg %p38
        $region14: #{tpu_custom_call.1} parent=11 // pred_check_branch
          %128 = sbr.rel (%p126) target = $region16
        $region15: #{tpu_custom_call.1} parent=11 // pred_region
          %s130 = ssub.s32 32, 32
          %131 = vsyncadd [#allocation5], %s130
          %134 = dma.hbm_to_smem %s0, 32, [#allocation2], [#allocation5]
        $region16: #{tpu_custom_call.1} parent=11 // pred_fallthru
          _
        // Predicated region
        $region17: #{tpu_custom_call.1} parent=11 // pred_check
          %p135 = pneg %p59
        $region18: #{tpu_custom_call.1} parent=11 // pred_check_branch
          %137 = sbr.rel (%p135) target = $region20
        $region19: #{tpu_custom_call.1} parent=11 // pred_region
          %s139 = ssub.s32 16, 16
          %140 = vsyncadd [#allocation6], %s139
          %s142 = sshll.u32 %s1, 4
          %s143 = int_to_ptr.vmem [resolvable:$true] %s142
          %145 = dma.vmem_to_smem %s143, 16, [#allocation7], [#allocation6]
        $region20: #{tpu_custom_call.1} parent=11 // pred_fallthru
          _
      $region12: #{tpu_custom_call.1} parent=5 // pred_fallthru
        _
      %p146 = scmp.lt.s32.totalorder %s17, 2
      // Predicated region
      $region21: #{tpu_custom_call.1} parent=5 // pred_check
        %p147 = pneg %p146
      $region22: #{tpu_custom_call.1} parent=5 // pred_check_branch
        %149 = sbr.rel (%p147) target = $region24
      $region23: #{tpu_custom_call.1} parent=5 // pred_region
        // Predicated region
        $region25: #{tpu_custom_call.1} parent=23 // pred_check
          %p150 = pneg %p79
        $region26: #{tpu_custom_call.1} parent=23 // pred_check_branch
          %152 = sbr.rel (%p150) target = $region28
        $region27: #{tpu_custom_call.1} parent=23 // pred_region
          #allocation11 [shape = 'u32[6]{0}', space=smem, size = 0x18, scoped, tag = 'DMA stride descriptor']
          %s153 = sand.u32 %s69, 1
          %s154 = scalar_lea.sflag [#allocation3], %s153
          %s155 = sand.u32 %s69, 1
          %s156 = smul.addr %s155, 144
          %s157 = scalar_lea.vmem [#allocation8], %s156
          %s158 = smul.u32 2, %s17
          %s160 = ssub.s32 2304, 2304
          %161 = vsyncadd %s154, %s160
          %s162 = smul.addr %s158, 128
          %s163 = scalar_lea.hbm %s2, %s162
          %s165 = sshll.u32 1, 14
          %s166 = sxor.u32 4294967295, %s165
          %s168 = sld [smem:[#allocation0]]
          %s169 = sadd.s32 2, %s168
          %s171 = sshll.u32 7, 26
          %s172 = sxor.u32 4294967295, %s171
          %s173 = sand.u32 0, %s172
          %s174 = sshll.u32 %s169, 26
          %s175 = sor.u32 %s173, %s174
          %s176 = sshll.u32 %s157, 4
          %s177 = int_to_ptr.vmem [resolvable:$true] %s176
          %183 = sst [smem:[#allocation11]] 512
          %s184 = scalar_lea.smem [#allocation11], 1
          %185 = sst [smem:[%s184]] 256
          %s186 = scalar_lea.smem [#allocation11], 2
          %187 = sst [smem:[%s186]] 2
          %s188 = scalar_lea.smem [#allocation11], 3
          %189 = sst [smem:[%s188]] 128
          %s190 = scalar_lea.smem [#allocation11], 4
          %191 = sst [smem:[%s190]] 128
          %s192 = scalar_lea.smem [#allocation11], 5
          %193 = sst [smem:[%s192]] 8
          %195 = dma.general %s163, 2304, %s177, %s154, 131072, [#allocation11], %s175, 0
        $region28: #{tpu_custom_call.1} parent=23 // pred_fallthru
          _
      $region24: #{tpu_custom_call.1} parent=5 // pred_fallthru
        _
      %p196 = scmp.le.s32.totalorder 1, %s17
      %p197 = scmp.lt.s32.totalorder %s17, 3
      %p198 = pnand %p196, %p197
      %p199 = pneg %p198
      // Predicated region
      $region29: #{tpu_custom_call.1} parent=5 // pred_check
        _
      $region30: #{tpu_custom_call.1} parent=5 // pred_check_branch
        %201 = sbr.rel (%p198) target = $region32
      $region31: #{tpu_custom_call.1} parent=5 // pred_region
        %s202 = ssub.s32 %s17, 1
        // Predicated region
        $region33: #{tpu_custom_call.1} parent=31 // pred_check
          %p203 = pneg %p38
        $region34: #{tpu_custom_call.1} parent=31 // pred_check_branch
          %205 = sbr.rel (%p203) target = $region36
        $region35: #{tpu_custom_call.1} parent=31 // pred_region
          %206 = dma.done [#allocation5], 32
        $region36: #{tpu_custom_call.1} parent=31 // pred_fallthru
          _
        // Predicated region
        $region37: #{tpu_custom_call.1} parent=31 // pred_check
          %p207 = pneg %p59
        $region38: #{tpu_custom_call.1} parent=31 // pred_check_branch
          %209 = sbr.rel (%p207) target = $region40
        $region39: #{tpu_custom_call.1} parent=31 // pred_region
          %210 = dma.done [#allocation6], 16
        $region40: #{tpu_custom_call.1} parent=31 // pred_fallthru
          _
        %s211 = sand.u32 %s72, 1
        %s212 = scalar_lea.sflag [#allocation3], %s211
        %s213 = sand.u32 %s72, 1
        %s214 = smul.addr %s213, 144
        %s215 = scalar_lea.vmem [#allocation8], %s214
        // Predicated region
        $region41: #{tpu_custom_call.1} parent=31 // pred_check
          %p216 = pneg %p85
        $region42: #{tpu_custom_call.1} parent=31 // pred_check_branch
          %218 = sbr.rel (%p216) target = $region44
        $region43: #{tpu_custom_call.1} parent=31 // pred_region
          %219 = dma.done %s212, 2304
        $region44: #{tpu_custom_call.1} parent=31 // pred_fallthru
          _
        %220 = sfence
        %p221 = pneg %p38
        %p222 = pneg %p35
        %p223 = pneg %p59
        %p224 = pneg %p56
        %s225 = sand.u32 %s72, 1
        %s226 = scalar_lea.sflag [#allocation3], %s225
        %s227 = sand.u32 %s72, 1
        %s228 = smul.addr %s227, 144
        %s229 = scalar_lea.vmem [#allocation8], %s228
        %p230 = pneg %p85
        %p231 = pneg %p82
        %p232 = pneg %p111
        %p233 = pneg %p108
        %s234 = sand.u32 %s98, 1
        %s235 = scalar_lea.sflag [#allocation4], %s234
        %s236 = sand.u32 %s98, 1
        %s237 = smul.addr %s236, 144
        %s238 = scalar_lea.vmem [#allocation9], %s237
        %s239 = smul.u32 2, %s22
        %s240 = smul.u32 2, %s22
        %s241 = sld [smem:[#allocation2]]
        %v242 = vstv %s241
        %s243 = sld [smem:[#allocation2 + $0x1]]
        %v244 = vstv %s243
        %s245 = sld [smem:[#allocation2 + $0x2]]
        %v246 = vstv %s245
        %s247 = sld [smem:[#allocation2 + $0x80]]
        %v248 = vstv %s247
        %s249 = sld [smem:[#allocation2 + $0x81]]
        %v250 = vstv %s249
        %s251 = sld [smem:[#allocation2 + $0x82]]
        %v252 = vstv %s251
        %s253 = sld [smem:[#allocation7]]
        %v254 = vstv %s253
        %s255 = sld [smem:[#allocation7 + $0x1]]
        %v256 = vstv %s255
        %s257 = sld [smem:[#allocation7 + $0x2]]
        %v258 = vstv %s257
        loop: start=0, step=1, limit=2
        $region45: #{tpu_custom_call.1} parent=31 // loop_pre_header
          _
        $region46: #{tpu_custom_call.1} parent=31 // loop_header
          %s260 = sphi 0, %s264
          %p261 = scmp.ge.s32.totalorder %s260, 2
        $region47: #{tpu_custom_call.1} parent=31 // loop_header_branch
          %263 = sbr.rel (%p261) target = $region51
        $region48: #{tpu_custom_call.1} parent=31 // loop_body
          %s265 = smul.u32 %s260, 8
          %s266 = scalar_lea.vmem %s215, %s265 [#allocation8]
          %v267 = vld [vmem:[%s266] sm:$0xff]
          %s268 = sadd.s32 %s265, 16
          %s269 = scalar_lea.vmem %s215, %s268 [#allocation8]
          %v270 = vld [vmem:[%s269] sm:$0xff]
          %s271 = sadd.s32 %s265, 32
          %s272 = scalar_lea.vmem %s215, %s271 [#allocation8]
          %v273 = vld [vmem:[%s272] sm:$0xff]
          %s274 = sadd.s32 %s265, 48
          %s275 = scalar_lea.vmem %s215, %s274 [#allocation8]
          %v276 = vld [vmem:[%s275] sm:$0xff]
          %s277 = sadd.s32 %s265, 64
          %s278 = scalar_lea.vmem %s215, %s277 [#allocation8]
          %v279 = vld [vmem:[%s278] sm:$0xff]
          %s280 = sadd.s32 %s265, 80
          %s281 = scalar_lea.vmem %s215, %s280 [#allocation8]
          %v282 = vld [vmem:[%s281] sm:$0xff]
          %s283 = sadd.s32 %s265, 96
          %s284 = scalar_lea.vmem %s215, %s283 [#allocation8]
          %v285 = vld [vmem:[%s284] sm:$0xff]
          %s286 = sadd.s32 %s265, 112
          %s287 = scalar_lea.vmem %s215, %s286 [#allocation8]
          %v288 = vld [vmem:[%s287] sm:$0xff]
          %s289 = sadd.s32 %s265, 128
          %s290 = scalar_lea.vmem %s215, %s289 [#allocation8]
          %v291 = vld [vmem:[%s290] sm:$0xff]
          %vm292 = vcmp.lt.f32.partialorder %v282, 19.0
          %v293 = vsel %vm292, 1, 0
          %v294 = vcvt.s32.f32 %v293
          %v295 = vmul.f32 %v267, %v242
          %v296 = vmul.f32 %v270, %v248
          %v297 = vadd.f32 %v295, %v296
          %v298 = vadd.f32 %v297, %v254
          %v299 = vmul.f32 %v267, %v244
          %v300 = vmul.f32 %v270, %v250
          %v301 = vadd.f32 %v299, %v300
          %v302 = vadd.f32 %v301, %v256
          %v303 = vmul.f32 %v267, %v246
          %v304 = vmul.f32 %v270, %v252
          %v305 = vadd.f32 %v303, %v304
          %v306 = vadd.f32 %v305, %v258
          %v307 = vsub.f32 %v302, %v298
          %v308 = vsub.f32 %v306, %v298
          %v309 = vsub.f32 %v306, %v302
          %vm310 = vcmp.le.f32.partialorder %v308, 0.0
          %v311 = vsel %vm310, -1.0, 1.0
          %vm312 = vcmp.le.f32.partialorder %v309, 0.0
          %v313 = vsel %vm312, 0.0, 1.0
          %vm314 = vcmp.le.f32.partialorder %v307, 0.0
          %v315 = vsel %vm314, %v311, %v313
          %v316 = vmul.f32 %v315, %v294
          %v317 = vadd.f32 %v267, %v316
          %v318 = vadd.f32 %v270, %v294
          %v319 = vadd.f32 %v282, %v294
          %v320 = vsel %vm292, %v298, %v273
          %v321 = vsel %vm292, %v302, %v276
          %v322 = vsel %vm292, %v306, %v279
          %v323 = vsel %vm292, %v307, %v285
          %v324 = vsel %vm292, %v308, %v288
          %v325 = vsel %vm292, %v309, %v291
          %vm326 = vcmp.lt.f32.partialorder %v319, 19.0
          %v327 = vsel %vm326, 1, 0
          %v328 = vcvt.s32.f32 %v327
          %v329 = vmul.f32 %v317, %v242
          %v330 = vmul.f32 %v318, %v248
          %v331 = vadd.f32 %v329, %v330
          %v332 = vadd.f32 %v331, %v254
          %v333 = vmul.f32 %v317, %v244
          %v334 = vmul.f32 %v318, %v250
          %v335 = vadd.f32 %v333, %v334
          %v336 = vadd.f32 %v335, %v256
          %v337 = vmul.f32 %v317, %v246
          %v338 = vmul.f32 %v318, %v252
          %v339 = vadd.f32 %v337, %v338
          %v340 = vadd.f32 %v339, %v258
          %v341 = vsub.f32 %v336, %v332
          %v342 = vsub.f32 %v340, %v332
          %v343 = vsub.f32 %v340, %v336
          %vm344 = vcmp.le.f32.partialorder %v342, 0.0
          %v345 = vsel %vm344, -1.0, 1.0
          %vm346 = vcmp.le.f32.partialorder %v343, 0.0
          %v347 = vsel %vm346, 0.0, 1.0
          %vm348 = vcmp.le.f32.partialorder %v341, 0.0
          %v349 = vsel %vm348, %v345, %v347
          %v350 = vmul.f32 %v349, %v328
          %v351 = vadd.f32 %v317, %v350
          %v352 = vadd.f32 %v318, %v328
          %v353 = vadd.f32 %v319, %v328
          %v354 = vsel %vm326, %v332, %v320
          %v355 = vsel %vm326, %v336, %v321
          %v356 = vsel %vm326, %v340, %v322
          %v357 = vsel %vm326, %v341, %v323
          %v358 = vsel %vm326, %v342, %v324
          %v359 = vsel %vm326, %v343, %v325
          %vm360 = vcmp.lt.f32.partialorder %v353, 19.0
          %v361 = vsel %vm360, 1, 0
          %v362 = vcvt.s32.f32 %v361
          %v363 = vmul.f32 %v351, %v242
          %v364 = vmul.f32 %v352, %v248
          %v365 = vadd.f32 %v363, %v364
          %v366 = vadd.f32 %v365, %v254
          %v367 = vmul.f32 %v351, %v244
          %v368 = vmul.f32 %v352, %v250
          %v369 = vadd.f32 %v367, %v368
          %v370 = vadd.f32 %v369, %v256
          %v371 = vmul.f32 %v351, %v246
          %v372 = vmul.f32 %v352, %v252
          %v373 = vadd.f32 %v371, %v372
          %v374 = vadd.f32 %v373, %v258
          %v375 = vsub.f32 %v370, %v366
          %v376 = vsub.f32 %v374, %v366
          %v377 = vsub.f32 %v374, %v370
          %vm378 = vcmp.le.f32.partialorder %v376, 0.0
          %v379 = vsel %vm378, -1.0, 1.0
          %vm380 = vcmp.le.f32.partialorder %v377, 0.0
          %v381 = vsel %vm380, 0.0, 1.0
          %vm382 = vcmp.le.f32.partialorder %v375, 0.0
          %v383 = vsel %vm382, %v379, %v381
          %v384 = vmul.f32 %v383, %v362
          %v385 = vadd.f32 %v351, %v384
          %v386 = vadd.f32 %v352, %v362
          %v387 = vadd.f32 %v353, %v362
          %v388 = vsel %vm360, %v366, %v354
          %v389 = vsel %vm360, %v370, %v355
          %v390 = vsel %vm360, %v374, %v356
          %v391 = vsel %vm360, %v375, %v357
          %v392 = vsel %vm360, %v376, %v358
          %v393 = vsel %vm360, %v377, %v359
          %vm394 = vcmp.lt.f32.partialorder %v387, 19.0
          %v395 = vsel %vm394, 1, 0
          %v396 = vcvt.s32.f32 %v395
          %v397 = vmul.f32 %v385, %v242
          %v398 = vmul.f32 %v386, %v248
          %v399 = vadd.f32 %v397, %v398
          %v400 = vadd.f32 %v399, %v254
          %v401 = vmul.f32 %v385, %v244
          %v402 = vmul.f32 %v386, %v250
          %v403 = vadd.f32 %v401, %v402
          %v404 = vadd.f32 %v403, %v256
          %v405 = vmul.f32 %v385, %v246
          %v406 = vmul.f32 %v386, %v252
          %v407 = vadd.f32 %v405, %v406
          %v408 = vadd.f32 %v407, %v258
          %v409 = vsub.f32 %v404, %v400
          %v410 = vsub.f32 %v408, %v400
          %v411 = vsub.f32 %v408, %v404
          %vm412 = vcmp.le.f32.partialorder %v410, 0.0
          %v413 = vsel %vm412, -1.0, 1.0
          %vm414 = vcmp.le.f32.partialorder %v411, 0.0
          %v415 = vsel %vm414, 0.0, 1.0
          %vm416 = vcmp.le.f32.partialorder %v409, 0.0
          %v417 = vsel %vm416, %v413, %v415
          %v418 = vmul.f32 %v417, %v396
          %v419 = vadd.f32 %v385, %v418
          %v420 = vadd.f32 %v386, %v396
          %v421 = vadd.f32 %v387, %v396
          %v422 = vsel %vm394, %v400, %v388
          %v423 = vsel %vm394, %v404, %v389
          %v424 = vsel %vm394, %v408, %v390
          %v425 = vsel %vm394, %v409, %v391
          %v426 = vsel %vm394, %v410, %v392
          %v427 = vsel %vm394, %v411, %v393
          %vm428 = vcmp.lt.f32.partialorder %v421, 19.0
          %v429 = vsel %vm428, 1, 0
          %v430 = vcvt.s32.f32 %v429
          %v431 = vmul.f32 %v419, %v242
          %v432 = vmul.f32 %v420, %v248
          %v433 = vadd.f32 %v431, %v432
          %v434 = vadd.f32 %v433, %v254
          %v435 = vmul.f32 %v419, %v244
          %v436 = vmul.f32 %v420, %v250
          %v437 = vadd.f32 %v435, %v436
          %v438 = vadd.f32 %v437, %v256
          %v439 = vmul.f32 %v419, %v246
          %v440 = vmul.f32 %v420, %v252
          %v441 = vadd.f32 %v439, %v440
          %v442 = vadd.f32 %v441, %v258
          %v443 = vsub.f32 %v438, %v434
          %v444 = vsub.f32 %v442, %v434
          %v445 = vsub.f32 %v442, %v438
          %vm446 = vcmp.le.f32.partialorder %v444, 0.0
          %v447 = vsel %vm446, -1.0, 1.0
          %vm448 = vcmp.le.f32.partialorder %v445, 0.0
          %v449 = vsel %vm448, 0.0, 1.0
          %vm450 = vcmp.le.f32.partialorder %v443, 0.0
          %v451 = vsel %vm450, %v447, %v449
          %v452 = vmul.f32 %v451, %v430
          %v453 = vadd.f32 %v419, %v452
          %v454 = vadd.f32 %v420, %v430
          %v455 = vadd.f32 %v421, %v430
          %v456 = vsel %vm428, %v434, %v422
          %v457 = vsel %vm428, %v438, %v423
          %v458 = vsel %vm428, %v442, %v424
          %v459 = vsel %vm428, %v443, %v425
          %v460 = vsel %vm428, %v444, %v426
          %v461 = vsel %vm428, %v445, %v427
          %vm462 = vcmp.lt.f32.partialorder %v455, 19.0
          %v463 = vsel %vm462, 1, 0
          %v464 = vcvt.s32.f32 %v463
          %v465 = vmul.f32 %v453, %v242
          %v466 = vmul.f32 %v454, %v248
          %v467 = vadd.f32 %v465, %v466
          %v468 = vadd.f32 %v467, %v254
          %v469 = vmul.f32 %v453, %v244
          %v470 = vmul.f32 %v454, %v250
          %v471 = vadd.f32 %v469, %v470
          %v472 = vadd.f32 %v471, %v256
          %v473 = vmul.f32 %v453, %v246
          %v474 = vmul.f32 %v454, %v252
          %v475 = vadd.f32 %v473, %v474
          %v476 = vadd.f32 %v475, %v258
          %v477 = vsub.f32 %v472, %v468
          %v478 = vsub.f32 %v476, %v468
          %v479 = vsub.f32 %v476, %v472
          %vm480 = vcmp.le.f32.partialorder %v478, 0.0
          %v481 = vsel %vm480, -1.0, 1.0
          %vm482 = vcmp.le.f32.partialorder %v479, 0.0
          %v483 = vsel %vm482, 0.0, 1.0
          %vm484 = vcmp.le.f32.partialorder %v477, 0.0
          %v485 = vsel %vm484, %v481, %v483
          %v486 = vmul.f32 %v485, %v464
          %v487 = vadd.f32 %v453, %v486
          %v488 = vadd.f32 %v454, %v464
          %v489 = vadd.f32 %v455, %v464
          %v490 = vsel %vm462, %v468, %v456
          %v491 = vsel %vm462, %v472, %v457
          %v492 = vsel %vm462, %v476, %v458
          %v493 = vsel %vm462, %v477, %v459
          %v494 = vsel %vm462, %v478, %v460
          %v495 = vsel %vm462, %v479, %v461
          %vm496 = vcmp.lt.f32.partialorder %v489, 19.0
          %v497 = vsel %vm496, 1, 0
          %v498 = vcvt.s32.f32 %v497
          %v499 = vmul.f32 %v487, %v242
          %v500 = vmul.f32 %v488, %v248
          %v501 = vadd.f32 %v499, %v500
          %v502 = vadd.f32 %v501, %v254
          %v503 = vmul.f32 %v487, %v244
          %v504 = vmul.f32 %v488, %v250
          %v505 = vadd.f32 %v503, %v504
          %v506 = vadd.f32 %v505, %v256
          %v507 = vmul.f32 %v487, %v246
          %v508 = vmul.f32 %v488, %v252
          %v509 = vadd.f32 %v507, %v508
          %v510 = vadd.f32 %v509, %v258
          %v511 = vsub.f32 %v506, %v502
          %v512 = vsub.f32 %v510, %v502
          %v513 = vsub.f32 %v510, %v506
          %vm514 = vcmp.le.f32.partialorder %v512, 0.0
          %v515 = vsel %vm514, -1.0, 1.0
          %vm516 = vcmp.le.f32.partialorder %v513, 0.0
          %v517 = vsel %vm516, 0.0, 1.0
          %vm518 = vcmp.le.f32.partialorder %v511, 0.0
          %v519 = vsel %vm518, %v515, %v517
          %v520 = vmul.f32 %v519, %v498
          %v521 = vadd.f32 %v487, %v520
          %v522 = vadd.f32 %v488, %v498
          %v523 = vadd.f32 %v489, %v498
          %v524 = vsel %vm496, %v502, %v490
          %v525 = vsel %vm496, %v506, %v491
          %v526 = vsel %vm496, %v510, %v492
          %v527 = vsel %vm496, %v511, %v493
          %v528 = vsel %vm496, %v512, %v494
          %v529 = vsel %vm496, %v513, %v495
          %vm530 = vcmp.lt.f32.partialorder %v523, 19.0
          %v531 = vsel %vm530, 1, 0
          %v532 = vcvt.s32.f32 %v531
          %v533 = vmul.f32 %v521, %v242
          %v534 = vmul.f32 %v522, %v248
          %v535 = vadd.f32 %v533, %v534
          %v536 = vadd.f32 %v535, %v254
          %v537 = vmul.f32 %v521, %v244
          %v538 = vmul.f32 %v522, %v250
          %v539 = vadd.f32 %v537, %v538
          %v540 = vadd.f32 %v539, %v256
          %v541 = vmul.f32 %v521, %v246
          %v542 = vmul.f32 %v522, %v252
          %v543 = vadd.f32 %v541, %v542
          %v544 = vadd.f32 %v543, %v258
          %v545 = vsub.f32 %v540, %v536
          %v546 = vsub.f32 %v544, %v536
          %v547 = vsub.f32 %v544, %v540
          %vm548 = vcmp.le.f32.partialorder %v546, 0.0
          %v549 = vsel %vm548, -1.0, 1.0
          %vm550 = vcmp.le.f32.partialorder %v547, 0.0
          %v551 = vsel %vm550, 0.0, 1.0
          %vm552 = vcmp.le.f32.partialorder %v545, 0.0
          %v553 = vsel %vm552, %v549, %v551
          %v554 = vmul.f32 %v553, %v532
          %v555 = vadd.f32 %v521, %v554
          %v556 = vadd.f32 %v522, %v532
          %v557 = vadd.f32 %v523, %v532
          %v558 = vsel %vm530, %v536, %v524
          %v559 = vsel %vm530, %v540, %v525
          %v560 = vsel %vm530, %v544, %v526
          %v561 = vsel %vm530, %v545, %v527
          %v562 = vsel %vm530, %v546, %v528
          %v563 = vsel %vm530, %v547, %v529
          %vm564 = vcmp.lt.f32.partialorder %v557, 19.0
          %v565 = vsel %vm564, 1, 0
          %v566 = vcvt.s32.f32 %v565
          %v567 = vmul.f32 %v555, %v242
          %v568 = vmul.f32 %v556, %v248
          %v569 = vadd.f32 %v567, %v568
          %v570 = vadd.f32 %v569, %v254
          %v571 = vmul.f32 %v555, %v244
          %v572 = vmul.f32 %v556, %v250
          %v573 = vadd.f32 %v571, %v572
          %v574 = vadd.f32 %v573, %v256
          %v575 = vmul.f32 %v555, %v246
          %v576 = vmul.f32 %v556, %v252
          %v577 = vadd.f32 %v575, %v576
          %v578 = vadd.f32 %v577, %v258
          %v579 = vsub.f32 %v574, %v570
          %v580 = vsub.f32 %v578, %v570
          %v581 = vsub.f32 %v578, %v574
          %vm582 = vcmp.le.f32.partialorder %v580, 0.0
          %v583 = vsel %vm582, -1.0, 1.0
          %vm584 = vcmp.le.f32.partialorder %v581, 0.0
          %v585 = vsel %vm584, 0.0, 1.0
          %vm586 = vcmp.le.f32.partialorder %v579, 0.0
          %v587 = vsel %vm586, %v583, %v585
          %v588 = vmul.f32 %v587, %v566
          %v589 = vadd.f32 %v555, %v588
          %v590 = vadd.f32 %v556, %v566
          %v591 = vadd.f32 %v557, %v566
          %v592 = vsel %vm564, %v570, %v558
          %v593 = vsel %vm564, %v574, %v559
          %v594 = vsel %vm564, %v578, %v560
          %v595 = vsel %vm564, %v579, %v561
          %v596 = vsel %vm564, %v580, %v562
          %v597 = vsel %vm564, %v581, %v563
          %vm598 = vcmp.lt.f32.partialorder %v591, 19.0
          %v599 = vsel %vm598, 1, 0
          %v600 = vcvt.s32.f32 %v599
          %v601 = vmul.f32 %v589, %v242
          %v602 = vmul.f32 %v590, %v248
          %v603 = vadd.f32 %v601, %v602
          %v604 = vadd.f32 %v603, %v254
          %v605 = vmul.f32 %v589, %v244
          %v606 = vmul.f32 %v590, %v250
          %v607 = vadd.f32 %v605, %v606
          %v608 = vadd.f32 %v607, %v256
          %v609 = vmul.f32 %v589, %v246
          %v610 = vmul.f32 %v590, %v252
          %v611 = vadd.f32 %v609, %v610
          %v612 = vadd.f32 %v611, %v258
          %v613 = vsub.f32 %v608, %v604
          %v614 = vsub.f32 %v612, %v604
          %v615 = vsub.f32 %v612, %v608
          %vm616 = vcmp.le.f32.partialorder %v614, 0.0
          %v617 = vsel %vm616, -1.0, 1.0
          %vm618 = vcmp.le.f32.partialorder %v615, 0.0
          %v619 = vsel %vm618, 0.0, 1.0
          %vm620 = vcmp.le.f32.partialorder %v613, 0.0
          %v621 = vsel %vm620, %v617, %v619
          %v622 = vmul.f32 %v621, %v600
          %v623 = vadd.f32 %v589, %v622
          %v624 = vadd.f32 %v590, %v600
          %v625 = vadd.f32 %v591, %v600
          %v626 = vsel %vm598, %v604, %v592
          %v627 = vsel %vm598, %v608, %v593
          %v628 = vsel %vm598, %v612, %v594
          %v629 = vsel %vm598, %v613, %v595
          %v630 = vsel %vm598, %v614, %v596
          %v631 = vsel %vm598, %v615, %v597
          %vm632 = vcmp.lt.f32.partialorder %v625, 19.0
          %v633 = vsel %vm632, 1, 0
          %v634 = vcvt.s32.f32 %v633
          %v635 = vmul.f32 %v623, %v242
          %v636 = vmul.f32 %v624, %v248
          %v637 = vadd.f32 %v635, %v636
          %v638 = vadd.f32 %v637, %v254
          %v639 = vmul.f32 %v623, %v244
          %v640 = vmul.f32 %v624, %v250
          %v641 = vadd.f32 %v639, %v640
          %v642 = vadd.f32 %v641, %v256
          %v643 = vmul.f32 %v623, %v246
          %v644 = vmul.f32 %v624, %v252
          %v645 = vadd.f32 %v643, %v644
          %v646 = vadd.f32 %v645, %v258
          %v647 = vsub.f32 %v642, %v638
          %v648 = vsub.f32 %v646, %v638
          %v649 = vsub.f32 %v646, %v642
          %vm650 = vcmp.le.f32.partialorder %v648, 0.0
          %v651 = vsel %vm650, -1.0, 1.0
          %vm652 = vcmp.le.f32.partialorder %v649, 0.0
          %v653 = vsel %vm652, 0.0, 1.0
          %vm654 = vcmp.le.f32.partialorder %v647, 0.0
          %v655 = vsel %vm654, %v651, %v653
          %v656 = vmul.f32 %v655, %v634
          %v657 = vadd.f32 %v623, %v656
          %v658 = vadd.f32 %v624, %v634
          %v659 = vadd.f32 %v625, %v634
          %v660 = vsel %vm632, %v638, %v626
          %v661 = vsel %vm632, %v642, %v627
          %v662 = vsel %vm632, %v646, %v628
          %v663 = vsel %vm632, %v647, %v629
          %v664 = vsel %vm632, %v648, %v630
          %v665 = vsel %vm632, %v649, %v631
          %vm666 = vcmp.lt.f32.partialorder %v659, 19.0
          %v667 = vsel %vm666, 1, 0
          %v668 = vcvt.s32.f32 %v667
          %v669 = vmul.f32 %v657, %v242
          %v670 = vmul.f32 %v658, %v248
          %v671 = vadd.f32 %v669, %v670
          %v672 = vadd.f32 %v671, %v254
          %v673 = vmul.f32 %v657, %v244
          %v674 = vmul.f32 %v658, %v250
          %v675 = vadd.f32 %v673, %v674
          %v676 = vadd.f32 %v675, %v256
          %v677 = vmul.f32 %v657, %v246
          %v678 = vmul.f32 %v658, %v252
          %v679 = vadd.f32 %v677, %v678
          %v680 = vadd.f32 %v679, %v258
          %v681 = vsub.f32 %v676, %v672
          %v682 = vsub.f32 %v680, %v672
          %v683 = vsub.f32 %v680, %v676
          %vm684 = vcmp.le.f32.partialorder %v682, 0.0
          %v685 = vsel %vm684, -1.0, 1.0
          %vm686 = vcmp.le.f32.partialorder %v683, 0.0
          %v687 = vsel %vm686, 0.0, 1.0
          %vm688 = vcmp.le.f32.partialorder %v681, 0.0
          %v689 = vsel %vm688, %v685, %v687
          %v690 = vmul.f32 %v689, %v668
          %v691 = vadd.f32 %v657, %v690
          %v692 = vadd.f32 %v658, %v668
          %v693 = vadd.f32 %v659, %v668
          %v694 = vsel %vm666, %v672, %v660
          %v695 = vsel %vm666, %v676, %v661
          %v696 = vsel %vm666, %v680, %v662
          %v697 = vsel %vm666, %v681, %v663
          %v698 = vsel %vm666, %v682, %v664
          %v699 = vsel %vm666, %v683, %v665
          %vm700 = vcmp.lt.f32.partialorder %v693, 19.0
          %v701 = vsel %vm700, 1, 0
          %v702 = vcvt.s32.f32 %v701
          %v703 = vmul.f32 %v691, %v242
          %v704 = vmul.f32 %v692, %v248
          %v705 = vadd.f32 %v703, %v704
          %v706 = vadd.f32 %v705, %v254
          %v707 = vmul.f32 %v691, %v244
          %v708 = vmul.f32 %v692, %v250
          %v709 = vadd.f32 %v707, %v708
          %v710 = vadd.f32 %v709, %v256
          %v711 = vmul.f32 %v691, %v246
          %v712 = vmul.f32 %v692, %v252
          %v713 = vadd.f32 %v711, %v712
          %v714 = vadd.f32 %v713, %v258
          %v715 = vsub.f32 %v710, %v706
          %v716 = vsub.f32 %v714, %v706
          %v717 = vsub.f32 %v714, %v710
          %vm718 = vcmp.le.f32.partialorder %v716, 0.0
          %v719 = vsel %vm718, -1.0, 1.0
          %vm720 = vcmp.le.f32.partialorder %v717, 0.0
          %v721 = vsel %vm720, 0.0, 1.0
          %vm722 = vcmp.le.f32.partialorder %v715, 0.0
          %v723 = vsel %vm722, %v719, %v721
          %v724 = vmul.f32 %v723, %v702
          %v725 = vadd.f32 %v691, %v724
          %v726 = vadd.f32 %v692, %v702
          %v727 = vadd.f32 %v693, %v702
          %v728 = vsel %vm700, %v706, %v694
          %v729 = vsel %vm700, %v710, %v695
          %v730 = vsel %vm700, %v714, %v696
          %v731 = vsel %vm700, %v715, %v697
          %v732 = vsel %vm700, %v716, %v698
          %v733 = vsel %vm700, %v717, %v699
          %vm734 = vcmp.lt.f32.partialorder %v727, 19.0
          %v735 = vsel %vm734, 1, 0
          %v736 = vcvt.s32.f32 %v735
          %v737 = vmul.f32 %v725, %v242
          %v738 = vmul.f32 %v726, %v248
          %v739 = vadd.f32 %v737, %v738
          %v740 = vadd.f32 %v739, %v254
          %v741 = vmul.f32 %v725, %v244
          %v742 = vmul.f32 %v726, %v250
          %v743 = vadd.f32 %v741, %v742
          %v744 = vadd.f32 %v743, %v256
          %v745 = vmul.f32 %v725, %v246
          %v746 = vmul.f32 %v726, %v252
          %v747 = vadd.f32 %v745, %v746
          %v748 = vadd.f32 %v747, %v258
          %v749 = vsub.f32 %v744, %v740
          %v750 = vsub.f32 %v748, %v740
          %v751 = vsub.f32 %v748, %v744
          %vm752 = vcmp.le.f32.partialorder %v750, 0.0
          %v753 = vsel %vm752, -1.0, 1.0
          %vm754 = vcmp.le.f32.partialorder %v751, 0.0
          %v755 = vsel %vm754, 0.0, 1.0
          %vm756 = vcmp.le.f32.partialorder %v749, 0.0
          %v757 = vsel %vm756, %v753, %v755
          %v758 = vmul.f32 %v757, %v736
          %v759 = vadd.f32 %v725, %v758
          %v760 = vadd.f32 %v726, %v736
          %v761 = vadd.f32 %v727, %v736
          %v762 = vsel %vm734, %v740, %v728
          %v763 = vsel %vm734, %v744, %v729
          %v764 = vsel %vm734, %v748, %v730
          %v765 = vsel %vm734, %v749, %v731
          %v766 = vsel %vm734, %v750, %v732
          %v767 = vsel %vm734, %v751, %v733
          %vm768 = vcmp.lt.f32.partialorder %v761, 19.0
          %v769 = vsel %vm768, 1, 0
          %v770 = vcvt.s32.f32 %v769
          %v771 = vmul.f32 %v759, %v242
          %v772 = vmul.f32 %v760, %v248
          %v773 = vadd.f32 %v771, %v772
          %v774 = vadd.f32 %v773, %v254
          %v775 = vmul.f32 %v759, %v244
          %v776 = vmul.f32 %v760, %v250
          %v777 = vadd.f32 %v775, %v776
          %v778 = vadd.f32 %v777, %v256
          %v779 = vmul.f32 %v759, %v246
          %v780 = vmul.f32 %v760, %v252
          %v781 = vadd.f32 %v779, %v780
          %v782 = vadd.f32 %v781, %v258
          %v783 = vsub.f32 %v778, %v774
          %v784 = vsub.f32 %v782, %v774
          %v785 = vsub.f32 %v782, %v778
          %vm786 = vcmp.le.f32.partialorder %v784, 0.0
          %v787 = vsel %vm786, -1.0, 1.0
          %vm788 = vcmp.le.f32.partialorder %v785, 0.0
          %v789 = vsel %vm788, 0.0, 1.0
          %vm790 = vcmp.le.f32.partialorder %v783, 0.0
          %v791 = vsel %vm790, %v787, %v789
          %v792 = vmul.f32 %v791, %v770
          %v793 = vadd.f32 %v759, %v792
          %v794 = vadd.f32 %v760, %v770
          %v795 = vadd.f32 %v761, %v770
          %v796 = vsel %vm768, %v774, %v762
          %v797 = vsel %vm768, %v778, %v763
          %v798 = vsel %vm768, %v782, %v764
          %v799 = vsel %vm768, %v783, %v765
          %v800 = vsel %vm768, %v784, %v766
          %v801 = vsel %vm768, %v785, %v767
          %vm802 = vcmp.lt.f32.partialorder %v795, 19.0
          %v803 = vsel %vm802, 1, 0
          %v804 = vcvt.s32.f32 %v803
          %v805 = vmul.f32 %v793, %v242
          %v806 = vmul.f32 %v794, %v248
          %v807 = vadd.f32 %v805, %v806
          %v808 = vadd.f32 %v807, %v254
          %v809 = vmul.f32 %v793, %v244
          %v810 = vmul.f32 %v794, %v250
          %v811 = vadd.f32 %v809, %v810
          %v812 = vadd.f32 %v811, %v256
          %v813 = vmul.f32 %v793, %v246
          %v814 = vmul.f32 %v794, %v252
          %v815 = vadd.f32 %v813, %v814
          %v816 = vadd.f32 %v815, %v258
          %v817 = vsub.f32 %v812, %v808
          %v818 = vsub.f32 %v816, %v808
          %v819 = vsub.f32 %v816, %v812
          %vm820 = vcmp.le.f32.partialorder %v818, 0.0
          %v821 = vsel %vm820, -1.0, 1.0
          %vm822 = vcmp.le.f32.partialorder %v819, 0.0
          %v823 = vsel %vm822, 0.0, 1.0
          %vm824 = vcmp.le.f32.partialorder %v817, 0.0
          %v825 = vsel %vm824, %v821, %v823
          %v826 = vmul.f32 %v825, %v804
          %v827 = vadd.f32 %v793, %v826
          %v828 = vadd.f32 %v794, %v804
          %v829 = vadd.f32 %v795, %v804
          %v830 = vsel %vm802, %v808, %v796
          %v831 = vsel %vm802, %v812, %v797
          %v832 = vsel %vm802, %v816, %v798
          %v833 = vsel %vm802, %v817, %v799
          %v834 = vsel %vm802, %v818, %v800
          %v835 = vsel %vm802, %v819, %v801
          %vm836 = vcmp.lt.f32.partialorder %v829, 19.0
          %v837 = vsel %vm836, 1, 0
          %v838 = vcvt.s32.f32 %v837
          %v839 = vmul.f32 %v827, %v242
          %v840 = vmul.f32 %v828, %v248
          %v841 = vadd.f32 %v839, %v840
          %v842 = vadd.f32 %v841, %v254
          %v843 = vmul.f32 %v827, %v244
          %v844 = vmul.f32 %v828, %v250
          %v845 = vadd.f32 %v843, %v844
          %v846 = vadd.f32 %v845, %v256
          %v847 = vmul.f32 %v827, %v246
          %v848 = vmul.f32 %v828, %v252
          %v849 = vadd.f32 %v847, %v848
          %v850 = vadd.f32 %v849, %v258
          %v851 = vsub.f32 %v846, %v842
          %v852 = vsub.f32 %v850, %v842
          %v853 = vsub.f32 %v850, %v846
          %vm854 = vcmp.le.f32.partialorder %v852, 0.0
          %v855 = vsel %vm854, -1.0, 1.0
          %vm856 = vcmp.le.f32.partialorder %v853, 0.0
          %v857 = vsel %vm856, 0.0, 1.0
          %vm858 = vcmp.le.f32.partialorder %v851, 0.0
          %v859 = vsel %vm858, %v855, %v857
          %v860 = vmul.f32 %v859, %v838
          %v861 = vadd.f32 %v827, %v860
          %v862 = vadd.f32 %v828, %v838
          %v863 = vadd.f32 %v829, %v838
          %v864 = vsel %vm836, %v842, %v830
          %v865 = vsel %vm836, %v846, %v831
          %v866 = vsel %vm836, %v850, %v832
          %v867 = vsel %vm836, %v851, %v833
          %v868 = vsel %vm836, %v852, %v834
          %v869 = vsel %vm836, %v853, %v835
          %vm870 = vcmp.lt.f32.partialorder %v863, 19.0
          %v871 = vsel %vm870, 1, 0
          %v872 = vcvt.s32.f32 %v871
          %v873 = vmul.f32 %v861, %v242
          %v874 = vmul.f32 %v862, %v248
          %v875 = vadd.f32 %v873, %v874
          %v876 = vadd.f32 %v875, %v254
          %v877 = vmul.f32 %v861, %v244
          %v878 = vmul.f32 %v862, %v250
          %v879 = vadd.f32 %v877, %v878
          %v880 = vadd.f32 %v879, %v256
          %v881 = vmul.f32 %v861, %v246
          %v882 = vmul.f32 %v862, %v252
          %v883 = vadd.f32 %v881, %v882
          %v884 = vadd.f32 %v883, %v258
          %v885 = vsub.f32 %v880, %v876
          %v886 = vsub.f32 %v884, %v876
          %v887 = vsub.f32 %v884, %v880
          %vm888 = vcmp.le.f32.partialorder %v886, 0.0
          %v889 = vsel %vm888, -1.0, 1.0
          %vm890 = vcmp.le.f32.partialorder %v887, 0.0
          %v891 = vsel %vm890, 0.0, 1.0
          %vm892 = vcmp.le.f32.partialorder %v885, 0.0
          %v893 = vsel %vm892, %v889, %v891
          %v894 = vmul.f32 %v893, %v872
          %v895 = vadd.f32 %v861, %v894
          %v896 = vadd.f32 %v862, %v872
          %v897 = vadd.f32 %v863, %v872
          %v898 = vsel %vm870, %v876, %v864
          %v899 = vsel %vm870, %v880, %v865
          %v900 = vsel %vm870, %v884, %v866
          %v901 = vsel %vm870, %v885, %v867
          %v902 = vsel %vm870, %v886, %v868
          %v903 = vsel %vm870, %v887, %v869
          %vm904 = vcmp.lt.f32.partialorder %v897, 19.0
          %v905 = vsel %vm904, 1, 0
          %v906 = vcvt.s32.f32 %v905
          %v907 = vmul.f32 %v895, %v242
          %v908 = vmul.f32 %v896, %v248
          %v909 = vadd.f32 %v907, %v908
          %v910 = vadd.f32 %v909, %v254
          %v911 = vmul.f32 %v895, %v244
          %v912 = vmul.f32 %v896, %v250
          %v913 = vadd.f32 %v911, %v912
          %v914 = vadd.f32 %v913, %v256
          %v915 = vmul.f32 %v895, %v246
          %v916 = vmul.f32 %v896, %v252
          %v917 = vadd.f32 %v915, %v916
          %v918 = vadd.f32 %v917, %v258
          %v919 = vsub.f32 %v914, %v910
          %v920 = vsub.f32 %v918, %v910
          %v921 = vsub.f32 %v918, %v914
          %vm922 = vcmp.le.f32.partialorder %v920, 0.0
          %v923 = vsel %vm922, -1.0, 1.0
          %vm924 = vcmp.le.f32.partialorder %v921, 0.0
          %v925 = vsel %vm924, 0.0, 1.0
          %vm926 = vcmp.le.f32.partialorder %v919, 0.0
          %v927 = vsel %vm926, %v923, %v925
          %v928 = vmul.f32 %v927, %v906
          %v929 = vadd.f32 %v895, %v928
          %v930 = vadd.f32 %v896, %v906
          %v931 = vadd.f32 %v897, %v906
          %v932 = vsel %vm904, %v910, %v898
          %v933 = vsel %vm904, %v914, %v899
          %v934 = vsel %vm904, %v918, %v900
          %v935 = vsel %vm904, %v919, %v901
          %v936 = vsel %vm904, %v920, %v902
          %v937 = vsel %vm904, %v921, %v903
          %s938 = scalar_lea.vmem %s238, %s265 [#allocation9]
          %939 = vst [vmem:[%s938] sm:$0xff] %v929
          %s940 = scalar_lea.vmem %s238, %s268 [#allocation9]
          %941 = vst [vmem:[%s940] sm:$0xff] %v930
          %s942 = scalar_lea.vmem %s238, %s271 [#allocation9]
          %943 = vst [vmem:[%s942] sm:$0xff] %v932
          %s944 = scalar_lea.vmem %s238, %s274 [#allocation9]
          %945 = vst [vmem:[%s944] sm:$0xff] %v933
          %s946 = scalar_lea.vmem %s238, %s277 [#allocation9]
          %947 = vst [vmem:[%s946] sm:$0xff] %v934
          %s948 = scalar_lea.vmem %s238, %s280 [#allocation9]
          %949 = vst [vmem:[%s948] sm:$0xff] %v931
          %s950 = scalar_lea.vmem %s238, %s283 [#allocation9]
          %951 = vst [vmem:[%s950] sm:$0xff] %v935
          %s952 = scalar_lea.vmem %s238, %s286 [#allocation9]
          %953 = vst [vmem:[%s952] sm:$0xff] %v936
          %s954 = scalar_lea.vmem %s238, %s289 [#allocation9]
          %955 = vst [vmem:[%s954] sm:$0xff] %v937
        $region49: #{tpu_custom_call.1} parent=31 // loop_footer
          %s264 = sadd.s32 1, %s260
        $region50: #{tpu_custom_call.1} parent=31 // loop_footer_branch
          %259 = sbr.rel target = $region46
        $region51: #{tpu_custom_call.1} parent=31 // loop_exit
          _
        %s956 = sand.u32 %s98, 1
        %s957 = scalar_lea.sflag [#allocation4], %s956
        %s958 = sand.u32 %s98, 1
        %s959 = smul.addr %s958, 144
        %s960 = scalar_lea.vmem [#allocation9], %s959
        // Predicated region
        $region52: #{tpu_custom_call.1} parent=31 // pred_check
          %p961 = pneg %p108
        $region53: #{tpu_custom_call.1} parent=31 // pred_check_branch
          %963 = sbr.rel (%p961) target = $region55
        $region54: #{tpu_custom_call.1} parent=31 // pred_region
          #allocation13 [shape = 'u32[6]{0}', space=smem, size = 0x18, scoped, tag = 'DMA stride descriptor']
          %s964 = smul.u32 2, %s22
          %s966 = ssub.s32 2304, 2304
          %967 = vsyncadd %s957, %s966
          %s968 = smul.addr %s964, 128
          %s969 = scalar_lea.hbm %s3, %s968
          %s971 = sshll.u32 1, 14
          %s972 = sxor.u32 4294967295, %s971
          %s975 = sshll.u32 7, 18
          %s976 = sxor.u32 4294967295, %s975
          %s977 = sand.u32 0, %s976
          %s979 = sor.u32 %s977, 0
          %s980 = sshll.u32 %s960, 4
          %s981 = int_to_ptr.vmem [resolvable:$true] %s980
          %987 = sst [smem:[#allocation13]] 256
          %s988 = scalar_lea.smem [#allocation13], 1
          %989 = sst [smem:[%s988]] 512
          %s990 = scalar_lea.smem [#allocation13], 2
          %991 = sst [smem:[%s990]] 2
          %s992 = scalar_lea.smem [#allocation13], 3
          %993 = sst [smem:[%s992]] 128
          %s994 = scalar_lea.smem [#allocation13], 4
          %995 = sst [smem:[%s994]] 128
          %s996 = scalar_lea.smem [#allocation13], 5
          %997 = sst [smem:[%s996]] 8
          %999 = dma.general %s981, 2304, %s969, %s957, 131072, [#allocation13], %s979, 0
        $region55: #{tpu_custom_call.1} parent=31 // pred_fallthru
          _
      $region32: #{tpu_custom_call.1} parent=5 // pred_fallthru
        _
      %p1000 = scmp.le.s32.totalorder 2, %s17
      // Predicated region
      $region56: #{tpu_custom_call.1} parent=5 // pred_check
        %p1001 = pneg %p1000
      $region57: #{tpu_custom_call.1} parent=5 // pred_check_branch
        %1003 = sbr.rel (%p1001) target = $region59
      $region58: #{tpu_custom_call.1} parent=5 // pred_region
        %s1004 = ssub.s32 %s17, 2
        // Predicated region
        $region60: #{tpu_custom_call.1} parent=58 // pred_check
          %p1005 = pneg %p114
        $region61: #{tpu_custom_call.1} parent=58 // pred_check_branch
          %1007 = sbr.rel (%p1005) target = $region63
        $region62: #{tpu_custom_call.1} parent=58 // pred_region
          %s1008 = sand.u32 %s99, 1
          %s1009 = scalar_lea.sflag [#allocation4], %s1008
          %s1010 = sand.u32 %s99, 1
          %s1011 = smul.addr %s1010, 144
          %s1012 = scalar_lea.vmem [#allocation9], %s1011
          %1013 = dma.done %s1009, 2304
        $region63: #{tpu_custom_call.1} parent=58 // pred_fallthru
          _
      $region59: #{tpu_custom_call.1} parent=5 // pred_fallthru
        _
    $region6: #{tpu_custom_call.1} parent=1 // loop_footer
      %s21 = sadd.s32 1, %s17
    $region7: #{tpu_custom_call.1} parent=1 // loop_footer_branch
      %16 = sbr.rel target = $region3
    $region8: #{tpu_custom_call.1} parent=1 // loop_exit
      _
    %1014 = vsyncpa [#allocation3], 1
    %s1015 = scalar_lea.sflag [#allocation3], 1
    %1016 = vsyncpa %s1015, 1
    %1017 = vsyncpa [#allocation4], 1
    %s1018 = scalar_lea.sflag [#allocation4], 1
    %1019 = vsyncpa %s1018, 1
    %1020 = vsyncpa [#allocation5], 1
    %s1021 = scalar_lea.sflag [#allocation5], 1
    %1022 = vsyncpa %s1021, 1
    %1023 = vsyncpa [#allocation6], 1
    %s1024 = scalar_lea.sflag [#allocation6], 1
    %1025 = vsyncpa %s1024, 1

</llo_original>
